<compile_context>
chip_gen: v7x
topology: tpu7x:2x2x1
jax: 0.10.0
libtpu: 0.0.40
codegen_flags: <defaults>
</compile_context>

<pallas_src>
import math

import jax
import jax.numpy as jnp
from jax.experimental import pallas as pl
from jax.experimental.pallas import tpu as pltpu

LANE = 128  # lane width; batch tiles are multiples of this


def _leaky_relu(x, negative_slope=0.01):
    return jnp.where(x > 0, x, negative_slope * x)


def _cdiv(a, b):
    return -(-a // b)


def _round_up(v, m):
    return _cdiv(v, m) * m


def value_func_kernel(x_ref, w1_ref, b1_ref, w2_ref, b2_ref, w3_ref, b3_ref, o_ref):
    # x tile: (input_dim, TILE_B) — features on sublanes, batch on lanes.
    # Weights are full [out, in] arrays, VMEM-resident (constant index_map).
    h = x_ref[...].astype(jnp.float32)

    # fc1 + leaky_relu: (fc1, in) @ (in, TILE_B) -> (fc1, TILE_B)
    h = jnp.dot(w1_ref[...], h, preferred_element_type=jnp.float32,
                precision=jax.lax.Precision.HIGHEST) + b1_ref[...]
    h = _leaky_relu(h)

    # fc2 + leaky_relu: (fc2, fc1) @ (fc1, TILE_B) -> (fc2, TILE_B)
    h = jnp.dot(w2_ref[...], h, preferred_element_type=jnp.float32,
                precision=jax.lax.Precision.HIGHEST) + b2_ref[...]
    h = _leaky_relu(h)

    # fc3 + leaky_relu (original module activates the last layer too):
    # (n_returns, fc2) @ (fc2, TILE_B) -> (n_returns, TILE_B)  — lane-dense row.
    h = jnp.dot(w3_ref[...], h, preferred_element_type=jnp.float32,
                precision=jax.lax.Precision.HIGHEST) + b3_ref[...]
    h = _leaky_relu(h)

    o_ref[...] = h.astype(o_ref.dtype)


def value_func_forward(x, params, *, max_tile_b=8192, stream_bf16=False):
    """x: [batch, input_dim] float32.

    params: dict of w1,b1,w2,b2,w3,b3 in PyTorch-native layout:
      w*: [out_features, in_features], b*: [out_features, 1].
    Returns [batch, n_returns] float32.
    """
    w1, b1 = params["w1"], params["b1"]
    w2, b2 = params["w2"], params["b2"]
    w3, b3 = params["w3"], params["b3"]

    batch, input_dim = x.shape
    fc1_dims, fc2_dims, n_returns = w1.shape[0], w2.shape[0], w3.shape[0]
    assert w1.shape == (fc1_dims, input_dim), "w1 must be [out, in]"
    assert w2.shape == (fc2_dims, fc1_dims), "w2 must be [out, in]"
    assert w3.shape == (n_returns, fc2_dims), "w3 must be [out, in]"
    assert b1.shape == (fc1_dims, 1)
    assert b2.shape == (fc2_dims, 1)
    assert b3.shape == (n_returns, 1)

    # Waste-aware, lane-dense tile selection.
    #  * >= 2 grid steps for large batches so both v7x TensorCores get work
    #    (no effect on single-core v5e/v6e).
    #  * tile_b = round_up(cdiv(batch, num_tiles), 128) keeps padding < 128
    #    rows instead of up to ~1 tile of waste.
    min_tiles = 2 if batch >= 2 * LANE else 1
    num_tiles = max(min_tiles, _cdiv(batch, max_tile_b))
    tile_b = _round_up(_cdiv(batch, num_tiles), LANE)
    b_pad = num_tiles * tile_b

    # Features on sublanes, batch on lanes.  (For very large batches the
    # producer should ideally hand us x already transposed in HBM.)
    xt = x.T
    if b_pad != batch:
        xt = jnp.pad(xt, ((0, 0), (0, b_pad - batch)))
    if stream_bf16:
        xt = xt.astype(jnp.bfloat16)  # halve HBM read bytes (v5e); f32 inside

    # Weights/biases: full-array blocks with constant index_map -> fetched
    # once, resident in VMEM across all grid steps.
    const_spec = lambda a: pl.BlockSpec(a.shape, lambda i: (0,) * a.ndim)

    out = pl.pallas_call(
        value_func_kernel,
        out_shape=jax.ShapeDtypeStruct((n_returns, b_pad), jnp.float32),
        grid=(num_tiles,),
        in_specs=[
            pl.BlockSpec((input_dim, tile_b), lambda i: (0, i)),  # x^T tiles
            const_spec(w1), const_spec(b1),
            const_spec(w2), const_spec(b2),
            const_spec(w3), const_spec(b3),
        ],
        out_specs=pl.BlockSpec((n_returns, tile_b), lambda i: (0, i)),
        compiler_params=pltpu.CompilerParams(
            dimension_semantics=("parallel",),  # megacore sharding on v7x
        ),
    )(xt, w1, b1, w2, b2, w3, b3)

    # (n_returns, b_pad) -> (batch, n_returns)
    return out[:, :batch].T


def init_params(key, input_dim, fc1_dims, fc2_dims, n_returns):
    """Mimics nn.Linear's U(-1/sqrt(fan_in), 1/sqrt(fan_in)); PyTorch [out, in] layout."""
    ks = jax.random.split(key, 6)

    def lin(kw, kb, fan_in, fan_out):
        bound = 1.0 / math.sqrt(fan_in)
        w = jax.random.uniform(kw, (fan_out, fan_in), jnp.float32, -bound, bound)
        b = jax.random.uniform(kb, (fan_out, 1), jnp.float32, -bound, bound)
        return w, b

    w1, b1 = lin(ks[0], ks[1], input_dim, fc1_dims)
    w2, b2 = lin(ks[2], ks[3], fc1_dims, fc2_dims)
    w3, b3 = lin(ks[4], ks[5], fc2_dims, n_returns)
    return {"w1": w1, "b1": b1, "w2": w2, "b2": b2, "w3": w3, "b3": b3}


def reference_forward(x, p):
    """Pure-JAX reference with the same [out, in] weight layout."""
    hp = jax.lax.Precision.HIGHEST
    h = jnp.dot(x, p["w1"].T, precision=hp) + p["b1"][:, 0]
    h = jnp.where(h > 0, h, 0.01 * h)
    h = jnp.dot(h, p["w2"].T, precision=hp) + p["b2"][:, 0]
    h = jnp.where(h > 0, h, 0.01 * h)
    h = jnp.dot(h, p["w3"].T, precision=hp) + p["b3"][:, 0]
    h = jnp.where(h > 0, h, 0.01 * h)
    return h


# TODO(synk): the Adam optimizer / lr bookkeeping in the PyTorch module is
# training-loop state, not part of the forward pass, so it is not ported.

if __name__ == "__main__":
    # Shapes consistent with the module: input_dims=(8,), fc1=32, fc2=32, n_returns=1
    input_dim, fc1_dims, fc2_dims, n_returns = 8, 32, 32, 1

    key = jax.random.PRNGKey(0)
    kx1, kx2, kp = jax.random.split(key, 3)
    params = init_params(kp, input_dim, fc1_dims, fc2_dims, n_returns)

    # Small demo batch (single grid step, batch padded to one 128-wide lane tile).
    x_small = jax.random.normal(kx1, (4, input_dim), jnp.float32)
    out_small = jax.block_until_ready(value_func_forward(x_small, params))
    ref_small = reference_forward(x_small, params)
    assert out_small.shape == (4, n_returns)
    assert jnp.allclose(out_small, ref_small, atol=1e-5, rtol=1e-5)

    # Non-multiple-of-tile batch: exercises the cdiv-based tile choice
    # (2 grid steps, tile_b=512, only 24 padded columns) and resident weights.
    x_big = jax.random.normal(kx2, (1000, input_dim), jnp.float32)
    out_big = jax.block_until_ready(value_func_forward(x_big, params))
    ref_big = reference_forward(x_big, params)
    assert out_big.shape == (1000, n_returns)
    assert jnp.allclose(out_big, ref_big, atol=1e-5, rtol=1e-5)

    print("KERNEL_OK")
</pallas_src>

<mosaic_0001>
module attributes {stable_mosaic.version = 11 : i64} {
  func.func @value_func_kernel(%arg0: i32, %arg1: memref<8x128xf32, #tpu.memory_space<vmem>>, %arg2: memref<32x8xf32, #tpu.memory_space<vmem>>, %arg3: memref<32x1xf32, #tpu.memory_space<vmem>>, %arg4: memref<32x32xf32, #tpu.memory_space<vmem>>, %arg5: memref<32x1xf32, #tpu.memory_space<vmem>>, %arg6: memref<1x32xf32, #tpu.memory_space<vmem>>, %arg7: memref<1x1xf32, #tpu.memory_space<vmem>>, %arg8: memref<1x128xf32, #tpu.memory_space<vmem>>) attributes {dimension_semantics = [#tpu.dimension_semantics<parallel>], iteration_bounds = array<i64: 1>, scalar_prefetch = 0 : i64, scratch_operands = 0 : i64, tpu.core_type = #tpu.core_type<tc>, window_params = [{transform_indices = @transform_0, window_bounds = array<i64: 8, 128>}, {pipeline_mode = #tpu.pipeline_mode<synchronous>, transform_indices = @transform_1, window_bounds = array<i64: 32, 8>}, {pipeline_mode = #tpu.pipeline_mode<synchronous>, transform_indices = @transform_2, window_bounds = array<i64: 32, 1>}, {pipeline_mode = #tpu.pipeline_mode<synchronous>, transform_indices = @transform_3, window_bounds = array<i64: 32, 32>}, {pipeline_mode = #tpu.pipeline_mode<synchronous>, transform_indices = @transform_4, window_bounds = array<i64: 32, 1>}, {pipeline_mode = #tpu.pipeline_mode<synchronous>, transform_indices = @transform_5, window_bounds = array<i64: 1, 32>}, {pipeline_mode = #tpu.pipeline_mode<synchronous>, transform_indices = @transform_6, window_bounds = array<i64: 1, 1>}, {transform_indices = @transform_7, window_bounds = array<i64: 1, 128>}]} {
    %c0 = arith.constant 0 : index
    %c0_0 = arith.constant 0 : index
    %0 = vector.load %arg1[%c0, %c0_0] : memref<8x128xf32, #tpu.memory_space<vmem>>, vector<8x128xf32>
    %c0_1 = arith.constant 0 : index
    %c0_2 = arith.constant 0 : index
    %1 = vector.load %arg2[%c0_1, %c0_2] : memref<32x8xf32, #tpu.memory_space<vmem>>, vector<32x8xf32>
    %cst = arith.constant dense<0.000000e+00> : vector<32x128xf32>
    %2 = tpu.matmul %1, %0, %cst {dimension_numbers = #tpu.dot_dimension_numbers<[1], [0], [0], [1], [0, 0, 1, 1], [], []>, precision = #tpu.contract_precision<fp32>} : vector<32x8xf32>, vector<8x128xf32>, vector<32x128xf32> -> vector<32x128xf32>
    %c0_3 = arith.constant 0 : index
    %c0_4 = arith.constant 0 : index
    %3 = vector.load %arg3[%c0_3, %c0_4] : memref<32x1xf32, #tpu.memory_space<vmem>>, vector<32x1xf32>
    %4 = vector.broadcast %3 : vector<32x1xf32> to vector<32x128xf32>
    %5 = arith.addf %2, %4 : vector<32x128xf32>
    %cst_5 = arith.constant 0.000000e+00 : f32
    %6 = vector.broadcast %cst_5 : f32 to vector<32x128xf32>
    %7 = arith.cmpf ogt, %5, %6 : vector<32x128xf32>
    %cst_6 = arith.constant 0.00999999977 : f32
    %8 = vector.broadcast %cst_6 : f32 to vector<32x128xf32>
    %9 = arith.mulf %8, %5 : vector<32x128xf32>
    %10 = arith.select %7, %5, %9 : vector<32x128xi1>, vector<32x128xf32>
    %c0_7 = arith.constant 0 : index
    %c0_8 = arith.constant 0 : index
    %11 = vector.load %arg4[%c0_7, %c0_8] : memref<32x32xf32, #tpu.memory_space<vmem>>, vector<32x32xf32>
    %cst_9 = arith.constant dense<0.000000e+00> : vector<32x128xf32>
    %12 = tpu.matmul %11, %10, %cst_9 {dimension_numbers = #tpu.dot_dimension_numbers<[1], [0], [0], [1], [0, 0, 1, 1], [], []>, precision = #tpu.contract_precision<fp32>} : vector<32x32xf32>, vector<32x128xf32>, vector<32x128xf32> -> vector<32x128xf32>
    %c0_10 = arith.constant 0 : index
    %c0_11 = arith.constant 0 : index
    %13 = vector.load %arg5[%c0_10, %c0_11] : memref<32x1xf32, #tpu.memory_space<vmem>>, vector<32x1xf32>
    %14 = vector.broadcast %13 : vector<32x1xf32> to vector<32x128xf32>
    %15 = arith.addf %12, %14 : vector<32x128xf32>
    %cst_12 = arith.constant 0.000000e+00 : f32
    %16 = vector.broadcast %cst_12 : f32 to vector<32x128xf32>
    %17 = arith.cmpf ogt, %15, %16 : vector<32x128xf32>
    %cst_13 = arith.constant 0.00999999977 : f32
    %18 = vector.broadcast %cst_13 : f32 to vector<32x128xf32>
    %19 = arith.mulf %18, %15 : vector<32x128xf32>
    %20 = arith.select %17, %15, %19 : vector<32x128xi1>, vector<32x128xf32>
    %c0_14 = arith.constant 0 : index
    %c0_15 = arith.constant 0 : index
    %21 = vector.load %arg6[%c0_14, %c0_15] : memref<1x32xf32, #tpu.memory_space<vmem>>, vector<1x32xf32>
    %cst_16 = arith.constant dense<0.000000e+00> : vector<1x128xf32>
    %22 = tpu.matmul %21, %20, %cst_16 {dimension_numbers = #tpu.dot_dimension_numbers<[1], [0], [0], [1], [0, 0, 1, 1], [], []>, precision = #tpu.contract_precision<fp32>} : vector<1x32xf32>, vector<32x128xf32>, vector<1x128xf32> -> vector<1x128xf32>
    %c0_17 = arith.constant 0 : index
    %c0_18 = arith.constant 0 : index
    %23 = vector.load %arg7[%c0_17, %c0_18] : memref<1x1xf32, #tpu.memory_space<vmem>>, vector<1x1xf32>
    %24 = vector.broadcast %23 : vector<1x1xf32> to vector<1x128xf32>
    %25 = arith.addf %22, %24 : vector<1x128xf32>
    %cst_19 = arith.constant 0.000000e+00 : f32
    %26 = vector.broadcast %cst_19 : f32 to vector<1x128xf32>
    %27 = arith.cmpf ogt, %25, %26 : vector<1x128xf32>
    %cst_20 = arith.constant 0.00999999977 : f32
    %28 = vector.broadcast %cst_20 : f32 to vector<1x128xf32>
    %29 = arith.mulf %28, %25 : vector<1x128xf32>
    %30 = arith.select %27, %25, %29 : vector<1x128xi1>, vector<1x128xf32>
    %c0_21 = arith.constant 0 : index
    %c0_22 = arith.constant 0 : index
    %31 = vector.load %arg8[%c0_21, %c0_22] : memref<1x128xf32, #tpu.memory_space<vmem>>, vector<1x128xf32>
    tpu.vector_store %arg8[%c0_21, %c0_22], %30 {strides = array<i32>} : memref<1x128xf32, #tpu.memory_space<vmem>>, vector<1x128xf32>,
    return
  }
  func.func @transform_0(%arg0: i32) -> (i32, i32) {
    %c0_i32 = arith.constant 0 : i32
    %c0_i32_0 = arith.constant 0 : i32
    return %c0_i32, %arg0 : i32, i32
  }
  func.func @transform_1(%arg0: i32) -> (i32, i32) {
    %c0_i32 = arith.constant 0 : i32
    %c0_i32_0 = arith.constant 0 : i32
    %c0_i32_1 = arith.constant 0 : i32
    return %c0_i32, %c0_i32_0 : i32, i32
  }
  func.func @transform_2(%arg0: i32) -> (i32, i32) {
    %c0_i32 = arith.constant 0 : i32
    %c0_i32_0 = arith.constant 0 : i32
    %c0_i32_1 = arith.constant 0 : i32
    return %c0_i32, %c0_i32_0 : i32, i32
  }
  func.func @transform_3(%arg0: i32) -> (i32, i32) {
    %c0_i32 = arith.constant 0 : i32
    %c0_i32_0 = arith.constant 0 : i32
    %c0_i32_1 = arith.constant 0 : i32
    return %c0_i32, %c0_i32_0 : i32, i32
  }
  func.func @transform_4(%arg0: i32) -> (i32, i32) {
    %c0_i32 = arith.constant 0 : i32
    %c0_i32_0 = arith.constant 0 : i32
    %c0_i32_1 = arith.constant 0 : i32
    return %c0_i32, %c0_i32_0 : i32, i32
  }
  func.func @transform_5(%arg0: i32) -> (i32, i32) {
    %c0_i32 = arith.constant 0 : i32
    %c0_i32_0 = arith.constant 0 : i32
    %c0_i32_1 = arith.constant 0 : i32
    return %c0_i32, %c0_i32_0 : i32, i32
  }
  func.func @transform_6(%arg0: i32) -> (i32, i32) {
    %c0_i32 = arith.constant 0 : i32
    %c0_i32_0 = arith.constant 0 : i32
    %c0_i32_1 = arith.constant 0 : i32
    return %c0_i32, %c0_i32_0 : i32, i32
  }
  func.func @transform_7(%arg0: i32) -> (i32, i32) {
    %c0_i32 = arith.constant 0 : i32
    %c0_i32_0 = arith.constant 0 : i32
    return %c0_i32, %arg0 : i32, i32
  }
}

</mosaic_0001>

<llo_original>
// kernel: tpu_custom_call.1
$region0: #{tpu_custom_call.1}
  #allocation0 [shape = 'u32[]', space=smem, size = 0x4, offset = 0x4, fixed_abs, tag = 'smem constant byte address 0x4 - core index']
  #allocation1 [shape = 'u32[144,128]{1,0:T(1,128)}', space=vmem, size = 0x12000, scoped, tag = 'internal scratch']
  #allocation2 [shape = 'f32[1,1]{1,0:T(1,128)S(1)}', space=vmem, size = 0x200, scoped, tag = 'scoped memory for tpu_custom_call.1']
  %s0 = inlined_call_operand.vmem [shape: f32[8,128], index: 0, kind: input, shape index: {}]
  %s1 = inlined_call_operand.vmem [shape: f32[32,8], index: 1, kind: input, shape index: {}]
  %s2 = inlined_call_operand.vmem [shape: f32[32,1], index: 2, kind: input, shape index: {}]
  %s3 = inlined_call_operand.vmem [shape: f32[32,32], index: 3, kind: input, shape index: {}]
  %s4 = inlined_call_operand.vmem [shape: f32[32,1], index: 4, kind: input, shape index: {}]
  %s5 = inlined_call_operand.vmem [shape: f32[1,32], index: 5, kind: input, shape index: {}]
  %s6 = inlined_call_operand.<no memory space> [shape: f32[1,1], index: 6, kind: input, shape index: {}]
  %s7 = inlined_call_operand.hbm [shape: f32[1,128], index: 7, kind: output, shape index: {}]
  %s8 = sld [smem:[#allocation0]]
  $region38: #{tpu_custom_call.1} parent=0
    _
  %s10 = ssub.s32 1, %s8
  %s11 = scalar_select 0, %s10, %s8
  %v12 = vstv %s6
  %13 = vst [vmem:[#allocation2] sm:$0x1] %v12
  $region1: #{tpu_custom_call.1} parent=0
    #allocation3 [shape = 'u8[512]{0}', space=vmem, size = 0x400, scoped, tag = 'output window, operand 0, single buffered']
    #allocation4 [shape = 's32[1]{0}', space=sflag, size = 0x4, scoped, tag = 'scoped memory for tpu_custom_call.1']
    %14 = vsyncpa [#allocation4], 0
    // Predicated region
    $region2: #{tpu_custom_call.1} parent=1 // pred_check
      _
    $region3: #{tpu_custom_call.1} parent=1 // pred_check_branch
      %16 = sbr.rel (0) target = $region5
    $region4: #{tpu_custom_call.1} parent=1 // pred_region
      _
    $region5: #{tpu_custom_call.1} parent=1 // pred_fallthru
      _
    // Predicated region
    $region6: #{tpu_custom_call.1} parent=1 // pred_check
      _
    $region7: #{tpu_custom_call.1} parent=1 // pred_check_branch
      %18 = sbr.rel (0) target = $region9
    $region8: #{tpu_custom_call.1} parent=1 // pred_region
      _
    $region9: #{tpu_custom_call.1} parent=1 // pred_fallthru
      _
    // Predicated region
    $region10: #{tpu_custom_call.1} parent=1 // pred_check
      _
    $region11: #{tpu_custom_call.1} parent=1 // pred_check_branch
      %20 = sbr.rel (0) target = $region13
    $region12: #{tpu_custom_call.1} parent=1 // pred_region
      _
    $region13: #{tpu_custom_call.1} parent=1 // pred_fallthru
      _
    // Predicated region
    $region14: #{tpu_custom_call.1} parent=1 // pred_check
      _
    $region15: #{tpu_custom_call.1} parent=1 // pred_check_branch
      %22 = sbr.rel (0) target = $region17
    $region16: #{tpu_custom_call.1} parent=1 // pred_region
      _
    $region17: #{tpu_custom_call.1} parent=1 // pred_fallthru
      _
    // Predicated region
    $region18: #{tpu_custom_call.1} parent=1 // pred_check
      _
    $region19: #{tpu_custom_call.1} parent=1 // pred_check_branch
      %24 = sbr.rel (0) target = $region21
    $region20: #{tpu_custom_call.1} parent=1 // pred_region
      _
    $region21: #{tpu_custom_call.1} parent=1 // pred_fallthru
      _
    // Predicated region
    $region22: #{tpu_custom_call.1} parent=1 // pred_check
      _
    $region23: #{tpu_custom_call.1} parent=1 // pred_check_branch
      %26 = sbr.rel (0) target = $region25
    $region24: #{tpu_custom_call.1} parent=1 // pred_region
      _
    $region25: #{tpu_custom_call.1} parent=1 // pred_fallthru
      _
    // Predicated region
    $region26: #{tpu_custom_call.1} parent=1 // pred_check
      _
    $region27: #{tpu_custom_call.1} parent=1 // pred_check_branch
      %28 = sbr.rel (0) target = $region29
    $region28: #{tpu_custom_call.1} parent=1 // pred_region
      _
    $region29: #{tpu_custom_call.1} parent=1 // pred_fallthru
      _
    %v29 = vld [vmem:[%s0] sm:$0xff]
    %v30 = vld [vmem:[%s1] sm:$0xff]
    %v31 = vld [vmem:[%s1 + $0x8] sm:$0xff]
    %v32 = vld [vmem:[%s1 + $0x10] sm:$0xff]
    %v33 = vld [vmem:[%s1 + $0x18] sm:$0xff]
    %v34 = vld [vmem:[%s2] sm:$0xff]
    %v35 = vld [vmem:[%s2 + $0x8] sm:$0xff]
    %v36 = vld [vmem:[%s2 + $0x10] sm:$0xff]
    %v37 = vld [vmem:[%s2 + $0x18] sm:$0xff]
    %39 = vset.pattern.permute.xlu0 0
    %40 = vperm.xlu0 %39, %v34
    %v41 = vpop.permute.xlu0 %40
    %44 = vset.pattern.permute.xlu0 0
    %45 = vperm.xlu0 %44, %v35
    %v46 = vpop.permute.xlu0 %45
    %49 = vset.pattern.permute.xlu0 0
    %50 = vperm.xlu0 %49, %v36
    %v51 = vpop.permute.xlu0 %50
    %54 = vset.pattern.permute.xlu0 0
    %55 = vperm.xlu0 %54, %v37
    %v56 = vpop.permute.xlu0 %55
    %vm58 = vcmask 64512
    %v60 = vsel %vm58, %v30, 0
    %v63 = vsel %vm58, %v31, 0
    %v66 = vsel %vm58, %v32, 0
    %v69 = vsel %vm58, %v33, 0
    %71 = vmatprep.subr.mxu0 0.0
    %v72 = vand.u32 %v29, 4294901760
    %73 = vmatpush1.msra.mxu0 %v72
    %74 = vmatprep.subr.mxu0 0.0
    %75 = vmatpush1.msra.mxu0 0.0
    %76 = vmatprep.subr.mxu0 0.0
    %77 = vmatpush1.msra.mxu0 0.0
    %78 = vmatprep.subr.mxu0 0.0
    %79 = vmatpush1.msra.mxu0 0.0
    %80 = vmatprep.subr.mxu0 0.0
    %81 = vmatpush1.msra.mxu0 0.0
    %82 = vmatprep.subr.mxu0 0.0
    %83 = vmatpush1.msra.mxu0 0.0
    %84 = vmatprep.subr.mxu0 0.0
    %85 = vmatpush1.msra.mxu0 0.0
    %86 = vmatprep.subr.mxu0 0.0
    %87 = vmatpush1.msra.mxu0 0.0
    %88 = vmatprep.subr.mxu0 0.0
    %89 = vmatpush1.msra.mxu0 0.0
    %90 = vmatprep.subr.mxu0 0.0
    %91 = vmatpush1.msra.mxu0 0.0
    %92 = vmatprep.subr.mxu0 0.0
    %93 = vmatpush1.msra.mxu0 0.0
    %94 = vmatprep.subr.mxu0 0.0
    %95 = vmatpush1.msra.mxu0 0.0
    %96 = vmatprep.subr.mxu0 0.0
    %97 = vmatpush1.msra.mxu0 0.0
    %98 = vmatprep.subr.mxu0 0.0
    %99 = vmatpush1.msra.mxu0 0.0
    %100 = vmatprep.subr.mxu0 0.0
    %101 = vmatpush1.msra.mxu0 0.0
    %102 = vmatprep.subr.mxu0 0.0
    %103 = vmatpush1.msra.mxu0 0.0
    %104 = vmatprep.subr.mxu0 0.0
    %105 = vmatpush1.msra.mxu0 0.0
    %106 = vmatprep.subr.mxu0 0.0
    %107 = vmatpush1.msra.mxu0 0.0
    %108 = vmatprep.subr.mxu0 0.0
    %109 = vmatpush1.msra.mxu0 0.0
    %110 = vmatprep.subr.mxu0 0.0
    %111 = vmatpush1.msra.mxu0 0.0
    %112 = vmatprep.subr.mxu0 0.0
    %113 = vmatpush1.msra.mxu0 0.0
    %114 = vmatprep.subr.mxu0 0.0
    %115 = vmatpush1.msra.mxu0 0.0
    %116 = vmatprep.subr.mxu0 0.0
    %117 = vmatpush1.msra.mxu0 0.0
    %118 = vmatprep.subr.mxu0 0.0
    %119 = vmatpush1.msra.mxu0 0.0
    %120 = vmatprep.subr.mxu0 0.0
    %121 = vmatpush1.msra.mxu0 0.0
    %122 = vmatprep.subr.mxu0 0.0
    %123 = vmatpush1.msra.mxu0 0.0
    %124 = vmatprep.subr.mxu0 0.0
    %125 = vmatpush1.msra.mxu0 0.0
    %126 = vmatprep.subr.mxu0 0.0
    %127 = vmatpush1.msra.mxu0 0.0
    %128 = vmatprep.subr.mxu0 0.0
    %129 = vmatpush1.msra.mxu0 0.0
    %130 = vmatprep.subr.mxu0 0.0
    %131 = vmatpush1.msra.mxu0 0.0
    %132 = vmatprep.subr.mxu0 0.0
    %133 = vmatpush1.msra.mxu0 0.0
    %134 = vmatprep.subr.mxu0 0.0
    %135 = vmatpush1.msra.mxu0 0.0
    %136 = vmatprep.mubr.f32.mxu0 0.0
    %v137 = vand.u32 %v60, 4294901760
    %v138 = vsub.f32 %v60, %v137
    %v139 = vand.u32 %v138, 4294901760
    %v140 = vsub.f32 %v138, %v139
    %v141 = vand.u32 %v140, 4294901760
    %142 = vmatmul.mubr.f32.gmra.mrb[0].mxu0 %v141
    %v143 = vpop.f32.mrb[0].mxu0
    %v144 = vadd.f32 %v41, %v143
    %v145 = vpop.f32.mrb[0].mxu0
    %146 = vmatprep.mubr.f32.mxu0 0.0
    %v147 = vand.u32 %v63, 4294901760
    %v148 = vsub.f32 %v63, %v147
    %v149 = vand.u32 %v148, 4294901760
    %v150 = vsub.f32 %v148, %v149
    %v151 = vand.u32 %v150, 4294901760
    %152 = vmatmul.mubr.f32.gmra.mrb[0].mxu0 %v151
    %v153 = vpop.f32.mrb[0].mxu0
    %v154 = vadd.f32 %v46, %v153
    %v155 = vpop.f32.mrb[0].mxu0
    %156 = vmatprep.mubr.f32.mxu0 0.0
    %v157 = vand.u32 %v66, 4294901760
    %v158 = vsub.f32 %v66, %v157
    %v159 = vand.u32 %v158, 4294901760
    %v160 = vsub.f32 %v158, %v159
    %v161 = vand.u32 %v160, 4294901760
    %162 = vmatmul.mubr.f32.gmra.mrb[0].mxu0 %v161
    %v163 = vpop.f32.mrb[0].mxu0
    %v164 = vadd.f32 %v51, %v163
    %v165 = vpop.f32.mrb[0].mxu0
    %166 = vmatprep.mubr.f32.mxu0 0.0
    %v167 = vand.u32 %v69, 4294901760
    %v168 = vsub.f32 %v69, %v167
    %v169 = vand.u32 %v168, 4294901760
    %v170 = vsub.f32 %v168, %v169
    %v171 = vand.u32 %v170, 4294901760
    %172 = vmatmul.mubr.f32.gmra.mrb[0].mxu0 %v171
    %v173 = vpop.f32.mrb[0].mxu0
    %v174 = vadd.f32 %v56, %v173
    %v175 = vpop.f32.mrb[0].mxu0
    %176 = vdwg.mxu0
    %177 = vmatprep.subr.mxu0 0.0
    %v178 = vand.u32 %v29, 4294901760
    %v179 = vsub.f32 %v29, %v178
    %v180 = vand.u32 %v179, 4294901760
    %v181 = vsub.f32 %v179, %v180
    %v182 = vand.u32 %v181, 4294901760
    %183 = vmatpush1.msra.mxu0 %v182
    %184 = vmatprep.subr.mxu0 0.0
    %185 = vmatpush1.msra.mxu0 0.0
    %186 = vmatprep.subr.mxu0 0.0
    %187 = vmatpush1.msra.mxu0 0.0
    %188 = vmatprep.subr.mxu0 0.0
    %189 = vmatpush1.msra.mxu0 0.0
    %190 = vmatprep.subr.mxu0 0.0
    %191 = vmatpush1.msra.mxu0 0.0
    %192 = vmatprep.subr.mxu0 0.0
    %193 = vmatpush1.msra.mxu0 0.0
    %194 = vmatprep.subr.mxu0 0.0
    %195 = vmatpush1.msra.mxu0 0.0
    %196 = vmatprep.subr.mxu0 0.0
    %197 = vmatpush1.msra.mxu0 0.0
    %198 = vmatprep.subr.mxu0 0.0
    %199 = vmatpush1.msra.mxu0 0.0
    %200 = vmatprep.subr.mxu0 0.0
    %201 = vmatpush1.msra.mxu0 0.0
    %202 = vmatprep.subr.mxu0 0.0
    %203 = vmatpush1.msra.mxu0 0.0
    %204 = vmatprep.subr.mxu0 0.0
    %205 = vmatpush1.msra.mxu0 0.0
    %206 = vmatprep.subr.mxu0 0.0
    %207 = vmatpush1.msra.mxu0 0.0
    %208 = vmatprep.subr.mxu0 0.0
    %209 = vmatpush1.msra.mxu0 0.0
    %210 = vmatprep.subr.mxu0 0.0
    %211 = vmatpush1.msra.mxu0 0.0
    %212 = vmatprep.subr.mxu0 0.0
    %213 = vmatpush1.msra.mxu0 0.0
    %214 = vmatprep.subr.mxu0 0.0
    %215 = vmatpush1.msra.mxu0 0.0
    %216 = vmatprep.subr.mxu0 0.0
    %217 = vmatpush1.msra.mxu0 0.0
    %218 = vmatprep.subr.mxu0 0.0
    %219 = vmatpush1.msra.mxu0 0.0
    %220 = vmatprep.subr.mxu0 0.0
    %221 = vmatpush1.msra.mxu0 0.0
    %222 = vmatprep.subr.mxu0 0.0
    %223 = vmatpush1.msra.mxu0 0.0
    %224 = vmatprep.subr.mxu0 0.0
    %225 = vmatpush1.msra.mxu0 0.0
    %226 = vmatprep.subr.mxu0 0.0
    %227 = vmatpush1.msra.mxu0 0.0
    %228 = vmatprep.subr.mxu0 0.0
    %229 = vmatpush1.msra.mxu0 0.0
    %230 = vmatprep.subr.mxu0 0.0
    %231 = vmatpush1.msra.mxu0 0.0
    %232 = vmatprep.subr.mxu0 0.0
    %233 = vmatpush1.msra.mxu0 0.0
    %234 = vmatprep.subr.mxu0 0.0
    %235 = vmatpush1.msra.mxu0 0.0
    %236 = vmatprep.subr.mxu0 0.0
    %237 = vmatpush1.msra.mxu0 0.0
    %238 = vmatprep.subr.mxu0 0.0
    %239 = vmatpush1.msra.mxu0 0.0
    %240 = vmatprep.subr.mxu0 0.0
    %241 = vmatpush1.msra.mxu0 0.0
    %242 = vmatprep.subr.mxu0 0.0
    %243 = vmatpush1.msra.mxu0 0.0
    %244 = vmatprep.subr.mxu0 0.0
    %245 = vmatpush1.msra.mxu0 0.0
    %246 = vmatprep.mubr.f32.mxu0 0.0
    %v247 = vand.u32 %v60, 4294901760
    %248 = vmatmul.mubr.f32.gmra.mrb[0].mxu0 %v247
    %v249 = vpop.f32.mrb[0].mxu0
    %v250 = vadd.f32 %v144, %v249
    %v251 = vpop.f32.mrb[0].mxu0
    %252 = vmatprep.mubr.f32.mxu0 0.0
    %v253 = vand.u32 %v63, 4294901760
    %254 = vmatmul.mubr.f32.gmra.mrb[0].mxu0 %v253
    %v255 = vpop.f32.mrb[0].mxu0
    %v256 = vadd.f32 %v154, %v255
    %v257 = vpop.f32.mrb[0].mxu0
    %258 = vmatprep.mubr.f32.mxu0 0.0
    %v259 = vand.u32 %v66, 4294901760
    %260 = vmatmul.mubr.f32.gmra.mrb[0].mxu0 %v259
    %v261 = vpop.f32.mrb[0].mxu0
    %v262 = vadd.f32 %v164, %v261
    %v263 = vpop.f32.mrb[0].mxu0
    %264 = vmatprep.mubr.f32.mxu0 0.0
    %v265 = vand.u32 %v69, 4294901760
    %266 = vmatmul.mubr.f32.gmra.mrb[0].mxu0 %v265
    %v267 = vpop.f32.mrb[0].mxu0
    %v268 = vadd.f32 %v174, %v267
    %v269 = vpop.f32.mrb[0].mxu0
    %270 = vdwg.mxu0
    %271 = vmatprep.subr.mxu0 0.0
    %v272 = vand.u32 %v29, 4294901760
    %v273 = vsub.f32 %v29, %v272
    %274 = vmatpush1.msra.mxu0 %v273
    %275 = vmatprep.subr.mxu0 0.0
    %276 = vmatpush1.msra.mxu0 0.0
    %277 = vmatprep.subr.mxu0 0.0
    %278 = vmatpush1.msra.mxu0 0.0
    %279 = vmatprep.subr.mxu0 0.0
    %280 = vmatpush1.msra.mxu0 0.0
    %281 = vmatprep.subr.mxu0 0.0
    %282 = vmatpush1.msra.mxu0 0.0
    %283 = vmatprep.subr.mxu0 0.0
    %284 = vmatpush1.msra.mxu0 0.0
    %285 = vmatprep.subr.mxu0 0.0
    %286 = vmatpush1.msra.mxu0 0.0
    %287 = vmatprep.subr.mxu0 0.0
    %288 = vmatpush1.msra.mxu0 0.0
    %289 = vmatprep.subr.mxu0 0.0
    %290 = vmatpush1.msra.mxu0 0.0
    %291 = vmatprep.subr.mxu0 0.0
    %292 = vmatpush1.msra.mxu0 0.0
    %293 = vmatprep.subr.mxu0 0.0
    %294 = vmatpush1.msra.mxu0 0.0
    %295 = vmatprep.subr.mxu0 0.0
    %296 = vmatpush1.msra.mxu0 0.0
    %297 = vmatprep.subr.mxu0 0.0
    %298 = vmatpush1.msra.mxu0 0.0
    %299 = vmatprep.subr.mxu0 0.0
    %300 = vmatpush1.msra.mxu0 0.0
    %301 = vmatprep.subr.mxu0 0.0
    %302 = vmatpush1.msra.mxu0 0.0
    %303 = vmatprep.subr.mxu0 0.0
    %304 = vmatpush1.msra.mxu0 0.0
    %305 = vmatprep.subr.mxu0 0.0
    %306 = vmatpush1.msra.mxu0 0.0
    %307 = vmatprep.subr.mxu0 0.0
    %308 = vmatpush1.msra.mxu0 0.0
    %309 = vmatprep.subr.mxu0 0.0
    %310 = vmatpush1.msra.mxu0 0.0
    %311 = vmatprep.subr.mxu0 0.0
    %312 = vmatpush1.msra.mxu0 0.0
    %313 = vmatprep.subr.mxu0 0.0
    %314 = vmatpush1.msra.mxu0 0.0
    %315 = vmatprep.subr.mxu0 0.0
    %316 = vmatpush1.msra.mxu0 0.0
    %317 = vmatprep.subr.mxu0 0.0
    %318 = vmatpush1.msra.mxu0 0.0
    %319 = vmatprep.subr.mxu0 0.0
    %320 = vmatpush1.msra.mxu0 0.0
    %321 = vmatprep.subr.mxu0 0.0
    %322 = vmatpush1.msra.mxu0 0.0
    %323 = vmatprep.subr.mxu0 0.0
    %324 = vmatpush1.msra.mxu0 0.0
    %325 = vmatprep.subr.mxu0 0.0
    %326 = vmatpush1.msra.mxu0 0.0
    %327 = vmatprep.subr.mxu0 0.0
    %328 = vmatpush1.msra.mxu0 0.0
    %329 = vmatprep.subr.mxu0 0.0
    %330 = vmatpush1.msra.mxu0 0.0
    %331 = vmatprep.subr.mxu0 0.0
    %332 = vmatpush1.msra.mxu0 0.0
    %333 = vmatprep.subr.mxu0 0.0
    %334 = vmatpush1.msra.mxu0 0.0
    %335 = vmatprep.subr.mxu0 0.0
    %336 = vmatpush1.msra.mxu0 0.0
    %337 = vmatprep.mubr.f32.mxu0 0.0
    %v338 = vand.u32 %v60, 4294901760
    %v339 = vsub.f32 %v60, %v338
    %340 = vmatmul.mubr.f32.gmra.mrb[0].mxu0 %v339
    %v341 = vpop.f32.mrb[0].mxu0
    %v342 = vadd.f32 %v250, %v341
    %v343 = vpop.f32.mrb[0].mxu0
    %344 = vmatprep.mubr.f32.mxu0 0.0
    %v345 = vand.u32 %v63, 4294901760
    %v346 = vsub.f32 %v63, %v345
    %347 = vmatmul.mubr.f32.gmra.mrb[0].mxu0 %v346
    %v348 = vpop.f32.mrb[0].mxu0
    %v349 = vadd.f32 %v256, %v348
    %v350 = vpop.f32.mrb[0].mxu0
    %351 = vmatprep.mubr.f32.mxu0 0.0
    %v352 = vand.u32 %v66, 4294901760
    %v353 = vsub.f32 %v66, %v352
    %354 = vmatmul.mubr.f32.gmra.mrb[0].mxu0 %v353
    %v355 = vpop.f32.mrb[0].mxu0
    %v356 = vadd.f32 %v262, %v355
    %v357 = vpop.f32.mrb[0].mxu0
    %358 = vmatprep.mubr.f32.mxu0 0.0
    %v359 = vand.u32 %v69, 4294901760
    %v360 = vsub.f32 %v69, %v359
    %361 = vmatmul.mubr.f32.gmra.mrb[0].mxu0 %v360
    %v362 = vpop.f32.mrb[0].mxu0
    %v363 = vadd.f32 %v268, %v362
    %v364 = vpop.f32.mrb[0].mxu0
    %365 = vdwg.mxu0
    %366 = vmatprep.subr.mxu0 0.0
    %v367 = vand.u32 %v29, 4294901760
    %368 = vmatpush1.msra.mxu0 %v367
    %369 = vmatprep.subr.mxu0 0.0
    %370 = vmatpush1.msra.mxu0 0.0
    %371 = vmatprep.subr.mxu0 0.0
    %372 = vmatpush1.msra.mxu0 0.0
    %373 = vmatprep.subr.mxu0 0.0
    %374 = vmatpush1.msra.mxu0 0.0
    %375 = vmatprep.subr.mxu0 0.0
    %376 = vmatpush1.msra.mxu0 0.0
    %377 = vmatprep.subr.mxu0 0.0
    %378 = vmatpush1.msra.mxu0 0.0
    %379 = vmatprep.subr.mxu0 0.0
    %380 = vmatpush1.msra.mxu0 0.0
    %381 = vmatprep.subr.mxu0 0.0
    %382 = vmatpush1.msra.mxu0 0.0
    %383 = vmatprep.subr.mxu0 0.0
    %384 = vmatpush1.msra.mxu0 0.0
    %385 = vmatprep.subr.mxu0 0.0
    %386 = vmatpush1.msra.mxu0 0.0
    %387 = vmatprep.subr.mxu0 0.0
    %388 = vmatpush1.msra.mxu0 0.0
    %389 = vmatprep.subr.mxu0 0.0
    %390 = vmatpush1.msra.mxu0 0.0
    %391 = vmatprep.subr.mxu0 0.0
    %392 = vmatpush1.msra.mxu0 0.0
    %393 = vmatprep.subr.mxu0 0.0
    %394 = vmatpush1.msra.mxu0 0.0
    %395 = vmatprep.subr.mxu0 0.0
    %396 = vmatpush1.msra.mxu0 0.0
    %397 = vmatprep.subr.mxu0 0.0
    %398 = vmatpush1.msra.mxu0 0.0
    %399 = vmatprep.subr.mxu0 0.0
    %400 = vmatpush1.msra.mxu0 0.0
    %401 = vmatprep.subr.mxu0 0.0
    %402 = vmatpush1.msra.mxu0 0.0
    %403 = vmatprep.subr.mxu0 0.0
    %404 = vmatpush1.msra.mxu0 0.0
    %405 = vmatprep.subr.mxu0 0.0
    %406 = vmatpush1.msra.mxu0 0.0
    %407 = vmatprep.subr.mxu0 0.0
    %408 = vmatpush1.msra.mxu0 0.0
    %409 = vmatprep.subr.mxu0 0.0
    %410 = vmatpush1.msra.mxu0 0.0
    %411 = vmatprep.subr.mxu0 0.0
    %412 = vmatpush1.msra.mxu0 0.0
    %413 = vmatprep.subr.mxu0 0.0
    %414 = vmatpush1.msra.mxu0 0.0
    %415 = vmatprep.subr.mxu0 0.0
    %416 = vmatpush1.msra.mxu0 0.0
    %417 = vmatprep.subr.mxu0 0.0
    %418 = vmatpush1.msra.mxu0 0.0
    %419 = vmatprep.subr.mxu0 0.0
    %420 = vmatpush1.msra.mxu0 0.0
    %421 = vmatprep.subr.mxu0 0.0
    %422 = vmatpush1.msra.mxu0 0.0
    %423 = vmatprep.subr.mxu0 0.0
    %424 = vmatpush1.msra.mxu0 0.0
    %425 = vmatprep.subr.mxu0 0.0
    %426 = vmatpush1.msra.mxu0 0.0
    %427 = vmatprep.subr.mxu0 0.0
    %428 = vmatpush1.msra.mxu0 0.0
    %429 = vmatprep.subr.mxu0 0.0
    %430 = vmatpush1.msra.mxu0 0.0
    %431 = vmatprep.mubr.f32.mxu0 0.0
    %v432 = vand.u32 %v60, 4294901760
    %v433 = vsub.f32 %v60, %v432
    %v434 = vand.u32 %v433, 4294901760
    %435 = vmatmul.mubr.f32.gmra.mrb[0].mxu0 %v434
    %v436 = vpop.f32.mrb[0].mxu0
    %v437 = vadd.f32 %v342, %v436
    %v438 = vpop.f32.mrb[0].mxu0
    %439 = vmatprep.mubr.f32.mxu0 0.0
    %v440 = vand.u32 %v63, 4294901760
    %v441 = vsub.f32 %v63, %v440
    %v442 = vand.u32 %v441, 4294901760
    %443 = vmatmul.mubr.f32.gmra.mrb[0].mxu0 %v442
    %v444 = vpop.f32.mrb[0].mxu0
    %v445 = vadd.f32 %v349, %v444
    %v446 = vpop.f32.mrb[0].mxu0
    %447 = vmatprep.mubr.f32.mxu0 0.0
    %v448 = vand.u32 %v66, 4294901760
    %v449 = vsub.f32 %v66, %v448
    %v450 = vand.u32 %v449, 4294901760
    %451 = vmatmul.mubr.f32.gmra.mrb[0].mxu0 %v450
    %v452 = vpop.f32.mrb[0].mxu0
    %v453 = vadd.f32 %v356, %v452
    %v454 = vpop.f32.mrb[0].mxu0
    %455 = vmatprep.mubr.f32.mxu0 0.0
    %v456 = vand.u32 %v69, 4294901760
    %v457 = vsub.f32 %v69, %v456
    %v458 = vand.u32 %v457, 4294901760
    %459 = vmatmul.mubr.f32.gmra.mrb[0].mxu0 %v458
    %v460 = vpop.f32.mrb[0].mxu0
    %v461 = vadd.f32 %v363, %v460
    %v462 = vpop.f32.mrb[0].mxu0
    %463 = vdwg.mxu0
    %464 = vmatprep.subr.mxu0 0.0
    %v465 = vand.u32 %v29, 4294901760
    %v466 = vsub.f32 %v29, %v465
    %v467 = vand.u32 %v466, 4294901760
    %468 = vmatpush1.msra.mxu0 %v467
    %469 = vmatprep.subr.mxu0 0.0
    %470 = vmatpush1.msra.mxu0 0.0
    %471 = vmatprep.subr.mxu0 0.0
    %472 = vmatpush1.msra.mxu0 0.0
    %473 = vmatprep.subr.mxu0 0.0
    %474 = vmatpush1.msra.mxu0 0.0
    %475 = vmatprep.subr.mxu0 0.0
    %476 = vmatpush1.msra.mxu0 0.0
    %477 = vmatprep.subr.mxu0 0.0
    %478 = vmatpush1.msra.mxu0 0.0
    %479 = vmatprep.subr.mxu0 0.0
    %480 = vmatpush1.msra.mxu0 0.0
    %481 = vmatprep.subr.mxu0 0.0
    %482 = vmatpush1.msra.mxu0 0.0
    %483 = vmatprep.subr.mxu0 0.0
    %484 = vmatpush1.msra.mxu0 0.0
    %485 = vmatprep.subr.mxu0 0.0
    %486 = vmatpush1.msra.mxu0 0.0
    %487 = vmatprep.subr.mxu0 0.0
    %488 = vmatpush1.msra.mxu0 0.0
    %489 = vmatprep.subr.mxu0 0.0
    %490 = vmatpush1.msra.mxu0 0.0
    %491 = vmatprep.subr.mxu0 0.0
    %492 = vmatpush1.msra.mxu0 0.0
    %493 = vmatprep.subr.mxu0 0.0
    %494 = vmatpush1.msra.mxu0 0.0
    %495 = vmatprep.subr.mxu0 0.0
    %496 = vmatpush1.msra.mxu0 0.0
    %497 = vmatprep.subr.mxu0 0.0
    %498 = vmatpush1.msra.mxu0 0.0
    %499 = vmatprep.subr.mxu0 0.0
    %500 = vmatpush1.msra.mxu0 0.0
    %501 = vmatprep.subr.mxu0 0.0
    %502 = vmatpush1.msra.mxu0 0.0
    %503 = vmatprep.subr.mxu0 0.0
    %504 = vmatpush1.msra.mxu0 0.0
    %505 = vmatprep.subr.mxu0 0.0
    %506 = vmatpush1.msra.mxu0 0.0
    %507 = vmatprep.subr.mxu0 0.0
    %508 = vmatpush1.msra.mxu0 0.0
    %509 = vmatprep.subr.mxu0 0.0
    %510 = vmatpush1.msra.mxu0 0.0
    %511 = vmatprep.subr.mxu0 0.0
    %512 = vmatpush1.msra.mxu0 0.0
    %513 = vmatprep.subr.mxu0 0.0
    %514 = vmatpush1.msra.mxu0 0.0
    %515 = vmatprep.subr.mxu0 0.0
    %516 = vmatpush1.msra.mxu0 0.0
    %517 = vmatprep.subr.mxu0 0.0
    %518 = vmatpush1.msra.mxu0 0.0
    %519 = vmatprep.subr.mxu0 0.0
    %520 = vmatpush1.msra.mxu0 0.0
    %521 = vmatprep.subr.mxu0 0.0
    %522 = vmatpush1.msra.mxu0 0.0
    %523 = vmatprep.subr.mxu0 0.0
    %524 = vmatpush1.msra.mxu0 0.0
    %525 = vmatprep.subr.mxu0 0.0
    %526 = vmatpush1.msra.mxu0 0.0
    %527 = vmatprep.subr.mxu0 0.0
    %528 = vmatpush1.msra.mxu0 0.0
    %529 = vmatprep.subr.mxu0 0.0
    %530 = vmatpush1.msra.mxu0 0.0
    %531 = vmatprep.mubr.f32.mxu0 0.0
    %v532 = vand.u32 %v60, 4294901760
    %533 = vmatmul.mubr.f32.gmra.mrb[0].mxu0 %v532
    %v534 = vpop.f32.mrb[0].mxu0
    %v535 = vadd.f32 %v437, %v534
    %v536 = vpop.f32.mrb[0].mxu0
    %537 = vmatprep.mubr.f32.mxu0 0.0
    %v538 = vand.u32 %v63, 4294901760
    %539 = vmatmul.mubr.f32.gmra.mrb[0].mxu0 %v538
    %v540 = vpop.f32.mrb[0].mxu0
    %v541 = vadd.f32 %v445, %v540
    %v542 = vpop.f32.mrb[0].mxu0
    %543 = vmatprep.mubr.f32.mxu0 0.0
    %v544 = vand.u32 %v66, 4294901760
    %545 = vmatmul.mubr.f32.gmra.mrb[0].mxu0 %v544
    %v546 = vpop.f32.mrb[0].mxu0
    %v547 = vadd.f32 %v453, %v546
    %v548 = vpop.f32.mrb[0].mxu0
    %549 = vmatprep.mubr.f32.mxu0 0.0
    %v550 = vand.u32 %v69, 4294901760
    %551 = vmatmul.mubr.f32.gmra.mrb[0].mxu0 %v550
    %v552 = vpop.f32.mrb[0].mxu0
    %v553 = vadd.f32 %v461, %v552
    %v554 = vpop.f32.mrb[0].mxu0
    %555 = vdwg.mxu0
    %556 = vmatprep.subr.mxu0 0.0
    %v557 = vand.u32 %v29, 4294901760
    %558 = vmatpush1.msra.mxu0 %v557
    %559 = vmatprep.subr.mxu0 0.0
    %560 = vmatpush1.msra.mxu0 0.0
    %561 = vmatprep.subr.mxu0 0.0
    %562 = vmatpush1.msra.mxu0 0.0
    %563 = vmatprep.subr.mxu0 0.0
    %564 = vmatpush1.msra.mxu0 0.0
    %565 = vmatprep.subr.mxu0 0.0
    %566 = vmatpush1.msra.mxu0 0.0
    %567 = vmatprep.subr.mxu0 0.0
    %568 = vmatpush1.msra.mxu0 0.0
    %569 = vmatprep.subr.mxu0 0.0
    %570 = vmatpush1.msra.mxu0 0.0
    %571 = vmatprep.subr.mxu0 0.0
    %572 = vmatpush1.msra.mxu0 0.0
    %573 = vmatprep.subr.mxu0 0.0
    %574 = vmatpush1.msra.mxu0 0.0
    %575 = vmatprep.subr.mxu0 0.0
    %576 = vmatpush1.msra.mxu0 0.0
    %577 = vmatprep.subr.mxu0 0.0
    %578 = vmatpush1.msra.mxu0 0.0
    %579 = vmatprep.subr.mxu0 0.0
    %580 = vmatpush1.msra.mxu0 0.0
    %581 = vmatprep.subr.mxu0 0.0
    %582 = vmatpush1.msra.mxu0 0.0
    %583 = vmatprep.subr.mxu0 0.0
    %584 = vmatpush1.msra.mxu0 0.0
    %585 = vmatprep.subr.mxu0 0.0
    %586 = vmatpush1.msra.mxu0 0.0
    %587 = vmatprep.subr.mxu0 0.0
    %588 = vmatpush1.msra.mxu0 0.0
    %589 = vmatprep.subr.mxu0 0.0
    %590 = vmatpush1.msra.mxu0 0.0
    %591 = vmatprep.subr.mxu0 0.0
    %592 = vmatpush1.msra.mxu0 0.0
    %593 = vmatprep.subr.mxu0 0.0
    %594 = vmatpush1.msra.mxu0 0.0
    %595 = vmatprep.subr.mxu0 0.0
    %596 = vmatpush1.msra.mxu0 0.0
    %597 = vmatprep.subr.mxu0 0.0
    %598 = vmatpush1.msra.mxu0 0.0
    %599 = vmatprep.subr.mxu0 0.0
    %600 = vmatpush1.msra.mxu0 0.0
    %601 = vmatprep.subr.mxu0 0.0
    %602 = vmatpush1.msra.mxu0 0.0
    %603 = vmatprep.subr.mxu0 0.0
    %604 = vmatpush1.msra.mxu0 0.0
    %605 = vmatprep.subr.mxu0 0.0
    %606 = vmatpush1.msra.mxu0 0.0
    %607 = vmatprep.subr.mxu0 0.0
    %608 = vmatpush1.msra.mxu0 0.0
    %609 = vmatprep.subr.mxu0 0.0
    %610 = vmatpush1.msra.mxu0 0.0
    %611 = vmatprep.subr.mxu0 0.0
    %612 = vmatpush1.msra.mxu0 0.0
    %613 = vmatprep.subr.mxu0 0.0
    %614 = vmatpush1.msra.mxu0 0.0
    %615 = vmatprep.subr.mxu0 0.0
    %616 = vmatpush1.msra.mxu0 0.0
    %617 = vmatprep.subr.mxu0 0.0
    %618 = vmatpush1.msra.mxu0 0.0
    %619 = vmatprep.subr.mxu0 0.0
    %620 = vmatpush1.msra.mxu0 0.0
    %621 = vmatprep.mubr.f32.mxu0 0.0
    %v622 = vand.u32 %v60, 4294901760
    %623 = vmatmul.mubr.f32.gmra.mrb[0].mxu0 %v622
    %v624 = vpop.f32.mrb[0].mxu0
    %v625 = vadd.f32 %v535, %v624
    %v626 = vpop.f32.mrb[0].mxu0
    %627 = vmatprep.mubr.f32.mxu0 0.0
    %v628 = vand.u32 %v63, 4294901760
    %629 = vmatmul.mubr.f32.gmra.mrb[0].mxu0 %v628
    %v630 = vpop.f32.mrb[0].mxu0
    %v631 = vadd.f32 %v541, %v630
    %v632 = vpop.f32.mrb[0].mxu0
    %633 = vmatprep.mubr.f32.mxu0 0.0
    %v634 = vand.u32 %v66, 4294901760
    %635 = vmatmul.mubr.f32.gmra.mrb[0].mxu0 %v634
    %v636 = vpop.f32.mrb[0].mxu0
    %v637 = vadd.f32 %v547, %v636
    %v638 = vpop.f32.mrb[0].mxu0
    %639 = vmatprep.mubr.f32.mxu0 0.0
    %v640 = vand.u32 %v69, 4294901760
    %641 = vmatmul.mubr.f32.gmra.mrb[0].mxu0 %v640
    %v642 = vpop.f32.mrb[0].mxu0
    %v643 = vadd.f32 %v553, %v642
    %v644 = vpop.f32.mrb[0].mxu0
    %645 = vdwg.mxu0
    %vm646 = vcmp.gt.f32.partialorder %v625, 0.0
    %vm647 = vcmp.gt.f32.partialorder %v631, 0.0
    %vm648 = vcmp.gt.f32.partialorder %v637, 0.0
    %vm649 = vcmp.gt.f32.partialorder %v643, 0.0
    %v650 = vmul.f32 %v625, 0.01
    %v651 = vmul.f32 %v631, 0.01
    %v652 = vmul.f32 %v637, 0.01
    %v653 = vmul.f32 %v643, 0.01
    %v654 = vsel %vm646, %v625, %v650
    %v655 = vsel %vm647, %v631, %v651
    %v656 = vsel %vm648, %v637, %v652
    %v657 = vsel %vm649, %v643, %v653
    %v658 = vld [vmem:[%s3] sm:$0xff]
    %v659 = vld [vmem:[%s3 + $0x8] sm:$0xff]
    %v660 = vld [vmem:[%s3 + $0x10] sm:$0xff]
    %v661 = vld [vmem:[%s3 + $0x18] sm:$0xff]
    %v662 = vld [vmem:[%s4] sm:$0xff]
    %v663 = vld [vmem:[%s4 + $0x8] sm:$0xff]
    %v664 = vld [vmem:[%s4 + $0x10] sm:$0xff]
    %v665 = vld [vmem:[%s4 + $0x18] sm:$0xff]
    %667 = vset.pattern.permute.xlu0 0
    %668 = vperm.xlu0 %667, %v662
    %v669 = vpop.permute.xlu0 %668
    %672 = vset.pattern.permute.xlu0 0
    %673 = vperm.xlu0 %672, %v663
    %v674 = vpop.permute.xlu0 %673
    %677 = vset.pattern.permute.xlu0 0
    %678 = vperm.xlu0 %677, %v664
    %v679 = vpop.permute.xlu0 %678
    %682 = vset.pattern.permute.xlu0 0
    %683 = vperm.xlu0 %682, %v665
    %v684 = vpop.permute.xlu0 %683
    %vm686 = vcmask 261120
    %v688 = vsel %vm686, %v658, 0
    %v691 = vsel %vm686, %v659, 0
    %v694 = vsel %vm686, %v660, 0
    %v697 = vsel %vm686, %v661, 0
    %699 = vmatprep.subr.mxu0 0.0
    %v700 = vand.u32 %v654, 4294901760
    %701 = vmatpush1.msra.mxu0 %v700
    %702 = vmatprep.subr.mxu0 0.0
    %v703 = vand.u32 %v655, 4294901760
    %704 = vmatpush1.msra.mxu0 %v703
    %705 = vmatprep.subr.mxu0 0.0
    %v706 = vand.u32 %v656, 4294901760
    %707 = vmatpush1.msra.mxu0 %v706
    %708 = vmatprep.subr.mxu0 0.0
    %v709 = vand.u32 %v657, 4294901760
    %710 = vmatpush1.msra.mxu0 %v709
    %711 = vmatprep.subr.mxu0 0.0
    %712 = vmatpush1.msra.mxu0 0.0
    %713 = vmatprep.subr.mxu0 0.0
    %714 = vmatpush1.msra.mxu0 0.0
    %715 = vmatprep.subr.mxu0 0.0
    %716 = vmatpush1.msra.mxu0 0.0
    %717 = vmatprep.subr.mxu0 0.0
    %718 = vmatpush1.msra.mxu0 0.0
    %719 = vmatprep.subr.mxu0 0.0
    %720 = vmatpush1.msra.mxu0 0.0
    %721 = vmatprep.subr.mxu0 0.0
    %722 = vmatpush1.msra.mxu0 0.0
    %723 = vmatprep.subr.mxu0 0.0
    %724 = vmatpush1.msra.mxu0 0.0
    %725 = vmatprep.subr.mxu0 0.0
    %726 = vmatpush1.msra.mxu0 0.0
    %727 = vmatprep.subr.mxu0 0.0
    %728 = vmatpush1.msra.mxu0 0.0
    %729 = vmatprep.subr.mxu0 0.0
    %730 = vmatpush1.msra.mxu0 0.0
    %731 = vmatprep.subr.mxu0 0.0
    %732 = vmatpush1.msra.mxu0 0.0
    %733 = vmatprep.subr.mxu0 0.0
    %734 = vmatpush1.msra.mxu0 0.0
    %735 = vmatprep.subr.mxu0 0.0
    %736 = vmatpush1.msra.mxu0 0.0
    %737 = vmatprep.subr.mxu0 0.0
    %738 = vmatpush1.msra.mxu0 0.0
    %739 = vmatprep.subr.mxu0 0.0
    %740 = vmatpush1.msra.mxu0 0.0
    %741 = vmatprep.subr.mxu0 0.0
    %742 = vmatpush1.msra.mxu0 0.0
    %743 = vmatprep.subr.mxu0 0.0
    %744 = vmatpush1.msra.mxu0 0.0
    %745 = vmatprep.subr.mxu0 0.0
    %746 = vmatpush1.msra.mxu0 0.0
    %747 = vmatprep.subr.mxu0 0.0
    %748 = vmatpush1.msra.mxu0 0.0
    %749 = vmatprep.subr.mxu0 0.0
    %750 = vmatpush1.msra.mxu0 0.0
    %751 = vmatprep.subr.mxu0 0.0
    %752 = vmatpush1.msra.mxu0 0.0
    %753 = vmatprep.subr.mxu0 0.0
    %754 = vmatpush1.msra.mxu0 0.0
    %755 = vmatprep.subr.mxu0 0.0
    %756 = vmatpush1.msra.mxu0 0.0
    %757 = vmatprep.subr.mxu0 0.0
    %758 = vmatpush1.msra.mxu0 0.0
    %759 = vmatprep.subr.mxu0 0.0
    %760 = vmatpush1.msra.mxu0 0.0
    %761 = vmatprep.subr.mxu0 0.0
    %762 = vmatpush1.msra.mxu0 0.0
    %763 = vmatprep.subr.mxu0 0.0
    %764 = vmatpush1.msra.mxu0 0.0
    %765 = vmatprep.subr.mxu0 0.0
    %766 = vmatpush1.msra.mxu0 0.0
    %767 = vmatprep.mubr.f32.mxu0 0.0
    %v768 = vand.u32 %v688, 4294901760
    %v769 = vsub.f32 %v688, %v768
    %v770 = vand.u32 %v769, 4294901760
    %v771 = vsub.f32 %v769, %v770
    %v772 = vand.u32 %v771, 4294901760
    %773 = vmatmul.mubr.f32.gmra.mrb[0].mxu0 %v772
    %v774 = vpop.f32.mrb[0].mxu0
    %v775 = vadd.f32 %v669, %v774
    %v776 = vpop.f32.mrb[0].mxu0
    %777 = vmatprep.mubr.f32.mxu0 0.0
    %v778 = vand.u32 %v691, 4294901760
    %v779 = vsub.f32 %v691, %v778
    %v780 = vand.u32 %v779, 4294901760
    %v781 = vsub.f32 %v779, %v780
    %v782 = vand.u32 %v781, 4294901760
    %783 = vmatmul.mubr.f32.gmra.mrb[0].mxu0 %v782
    %v784 = vpop.f32.mrb[0].mxu0
    %v785 = vadd.f32 %v674, %v784
    %v786 = vpop.f32.mrb[0].mxu0
    %787 = vmatprep.mubr.f32.mxu0 0.0
    %v788 = vand.u32 %v694, 4294901760
    %v789 = vsub.f32 %v694, %v788
    %v790 = vand.u32 %v789, 4294901760
    %v791 = vsub.f32 %v789, %v790
    %v792 = vand.u32 %v791, 4294901760
    %793 = vmatmul.mubr.f32.gmra.mrb[0].mxu0 %v792
    %v794 = vpop.f32.mrb[0].mxu0
    %v795 = vadd.f32 %v679, %v794
    %v796 = vpop.f32.mrb[0].mxu0
    %797 = vmatprep.mubr.f32.mxu0 0.0
    %v798 = vand.u32 %v697, 4294901760
    %v799 = vsub.f32 %v697, %v798
    %v800 = vand.u32 %v799, 4294901760
    %v801 = vsub.f32 %v799, %v800
    %v802 = vand.u32 %v801, 4294901760
    %803 = vmatmul.mubr.f32.gmra.mrb[0].mxu0 %v802
    %v804 = vpop.f32.mrb[0].mxu0
    %v805 = vadd.f32 %v684, %v804
    %v806 = vpop.f32.mrb[0].mxu0
    %807 = vdwg.mxu0
    %808 = vmatprep.subr.mxu0 0.0
    %v809 = vand.u32 %v654, 4294901760
    %v810 = vsub.f32 %v654, %v809
    %v811 = vand.u32 %v810, 4294901760
    %v812 = vsub.f32 %v810, %v811
    %v813 = vand.u32 %v812, 4294901760
    %814 = vmatpush1.msra.mxu0 %v813
    %815 = vmatprep.subr.mxu0 0.0
    %v816 = vand.u32 %v655, 4294901760
    %v817 = vsub.f32 %v655, %v816
    %v818 = vand.u32 %v817, 4294901760
    %v819 = vsub.f32 %v817, %v818
    %v820 = vand.u32 %v819, 4294901760
    %821 = vmatpush1.msra.mxu0 %v820
    %822 = vmatprep.subr.mxu0 0.0
    %v823 = vand.u32 %v656, 4294901760
    %v824 = vsub.f32 %v656, %v823
    %v825 = vand.u32 %v824, 4294901760
    %v826 = vsub.f32 %v824, %v825
    %v827 = vand.u32 %v826, 4294901760
    %828 = vmatpush1.msra.mxu0 %v827
    %829 = vmatprep.subr.mxu0 0.0
    %v830 = vand.u32 %v657, 4294901760
    %v831 = vsub.f32 %v657, %v830
    %v832 = vand.u32 %v831, 4294901760
    %v833 = vsub.f32 %v831, %v832
    %v834 = vand.u32 %v833, 4294901760
    %835 = vmatpush1.msra.mxu0 %v834
    %836 = vmatprep.subr.mxu0 0.0
    %837 = vmatpush1.msra.mxu0 0.0
    %838 = vmatprep.subr.mxu0 0.0
    %839 = vmatpush1.msra.mxu0 0.0
    %840 = vmatprep.subr.mxu0 0.0
    %841 = vmatpush1.msra.mxu0 0.0
    %842 = vmatprep.subr.mxu0 0.0
    %843 = vmatpush1.msra.mxu0 0.0
    %844 = vmatprep.subr.mxu0 0.0
    %845 = vmatpush1.msra.mxu0 0.0
    %846 = vmatprep.subr.mxu0 0.0
    %847 = vmatpush1.msra.mxu0 0.0
    %848 = vmatprep.subr.mxu0 0.0
    %849 = vmatpush1.msra.mxu0 0.0
    %850 = vmatprep.subr.mxu0 0.0
    %851 = vmatpush1.msra.mxu0 0.0
    %852 = vmatprep.subr.mxu0 0.0
    %853 = vmatpush1.msra.mxu0 0.0
    %854 = vmatprep.subr.mxu0 0.0
    %855 = vmatpush1.msra.mxu0 0.0
    %856 = vmatprep.subr.mxu0 0.0
    %857 = vmatpush1.msra.mxu0 0.0
    %858 = vmatprep.subr.mxu0 0.0
    %859 = vmatpush1.msra.mxu0 0.0
    %860 = vmatprep.subr.mxu0 0.0
    %861 = vmatpush1.msra.mxu0 0.0
    %862 = vmatprep.subr.mxu0 0.0
    %863 = vmatpush1.msra.mxu0 0.0
    %864 = vmatprep.subr.mxu0 0.0
    %865 = vmatpush1.msra.mxu0 0.0
    %866 = vmatprep.subr.mxu0 0.0
    %867 = vmatpush1.msra.mxu0 0.0
    %868 = vmatprep.subr.mxu0 0.0
    %869 = vmatpush1.msra.mxu0 0.0
    %870 = vmatprep.subr.mxu0 0.0
    %871 = vmatpush1.msra.mxu0 0.0
    %872 = vmatprep.subr.mxu0 0.0
    %873 = vmatpush1.msra.mxu0 0.0
    %874 = vmatprep.subr.mxu0 0.0
    %875 = vmatpush1.msra.mxu0 0.0
    %876 = vmatprep.subr.mxu0 0.0
    %877 = vmatpush1.msra.mxu0 0.0
    %878 = vmatprep.subr.mxu0 0.0
    %879 = vmatpush1.msra.mxu0 0.0
    %880 = vmatprep.subr.mxu0 0.0
    %881 = vmatpush1.msra.mxu0 0.0
    %882 = vmatprep.subr.mxu0 0.0
    %883 = vmatpush1.msra.mxu0 0.0
    %884 = vmatprep.subr.mxu0 0.0
    %885 = vmatpush1.msra.mxu0 0.0
    %886 = vmatprep.subr.mxu0 0.0
    %887 = vmatpush1.msra.mxu0 0.0
    %888 = vmatprep.subr.mxu0 0.0
    %889 = vmatpush1.msra.mxu0 0.0
    %890 = vmatprep.subr.mxu0 0.0
    %891 = vmatpush1.msra.mxu0 0.0
    %892 = vmatprep.mubr.f32.mxu0 0.0
    %v893 = vand.u32 %v688, 4294901760
    %894 = vmatmul.mubr.f32.gmra.mrb[0].mxu0 %v893
    %v895 = vpop.f32.mrb[0].mxu0
    %v896 = vadd.f32 %v775, %v895
    %v897 = vpop.f32.mrb[0].mxu0
    %898 = vmatprep.mubr.f32.mxu0 0.0
    %v899 = vand.u32 %v691, 4294901760
    %900 = vmatmul.mubr.f32.gmra.mrb[0].mxu0 %v899
    %v901 = vpop.f32.mrb[0].mxu0
    %v902 = vadd.f32 %v785, %v901
    %v903 = vpop.f32.mrb[0].mxu0
    %904 = vmatprep.mubr.f32.mxu0 0.0
    %v905 = vand.u32 %v694, 4294901760
    %906 = vmatmul.mubr.f32.gmra.mrb[0].mxu0 %v905
    %v907 = vpop.f32.mrb[0].mxu0
    %v908 = vadd.f32 %v795, %v907
    %v909 = vpop.f32.mrb[0].mxu0
    %910 = vmatprep.mubr.f32.mxu0 0.0
    %v911 = vand.u32 %v697, 4294901760
    %912 = vmatmul.mubr.f32.gmra.mrb[0].mxu0 %v911
    %v913 = vpop.f32.mrb[0].mxu0
    %v914 = vadd.f32 %v805, %v913
    %v915 = vpop.f32.mrb[0].mxu0
    %916 = vdwg.mxu0
    %917 = vmatprep.subr.mxu0 0.0
    %v918 = vand.u32 %v654, 4294901760
    %v919 = vsub.f32 %v654, %v918
    %920 = vmatpush1.msra.mxu0 %v919
    %921 = vmatprep.subr.mxu0 0.0
    %v922 = vand.u32 %v655, 4294901760
    %v923 = vsub.f32 %v655, %v922
    %924 = vmatpush1.msra.mxu0 %v923
    %925 = vmatprep.subr.mxu0 0.0
    %v926 = vand.u32 %v656, 4294901760
    %v927 = vsub.f32 %v656, %v926
    %928 = vmatpush1.msra.mxu0 %v927
    %929 = vmatprep.subr.mxu0 0.0
    %v930 = vand.u32 %v657, 4294901760
    %v931 = vsub.f32 %v657, %v930
    %932 = vmatpush1.msra.mxu0 %v931
    %933 = vmatprep.subr.mxu0 0.0
    %934 = vmatpush1.msra.mxu0 0.0
    %935 = vmatprep.subr.mxu0 0.0
    %936 = vmatpush1.msra.mxu0 0.0
    %937 = vmatprep.subr.mxu0 0.0
    %938 = vmatpush1.msra.mxu0 0.0
    %939 = vmatprep.subr.mxu0 0.0
    %940 = vmatpush1.msra.mxu0 0.0
    %941 = vmatprep.subr.mxu0 0.0
    %942 = vmatpush1.msra.mxu0 0.0
    %943 = vmatprep.subr.mxu0 0.0
    %944 = vmatpush1.msra.mxu0 0.0
    %945 = vmatprep.subr.mxu0 0.0
    %946 = vmatpush1.msra.mxu0 0.0
    %947 = vmatprep.subr.mxu0 0.0
    %948 = vmatpush1.msra.mxu0 0.0
    %949 = vmatprep.subr.mxu0 0.0
    %950 = vmatpush1.msra.mxu0 0.0
    %951 = vmatprep.subr.mxu0 0.0
    %952 = vmatpush1.msra.mxu0 0.0
    %953 = vmatprep.subr.mxu0 0.0
    %954 = vmatpush1.msra.mxu0 0.0
    %955 = vmatprep.subr.mxu0 0.0
    %956 = vmatpush1.msra.mxu0 0.0
    %957 = vmatprep.subr.mxu0 0.0
    %958 = vmatpush1.msra.mxu0 0.0
    %959 = vmatprep.subr.mxu0 0.0
    %960 = vmatpush1.msra.mxu0 0.0
    %961 = vmatprep.subr.mxu0 0.0
    %962 = vmatpush1.msra.mxu0 0.0
    %963 = vmatprep.subr.mxu0 0.0
    %964 = vmatpush1.msra.mxu0 0.0
    %965 = vmatprep.subr.mxu0 0.0
    %966 = vmatpush1.msra.mxu0 0.0
    %967 = vmatprep.subr.mxu0 0.0
    %968 = vmatpush1.msra.mxu0 0.0
    %969 = vmatprep.subr.mxu0 0.0
    %970 = vmatpush1.msra.mxu0 0.0
    %971 = vmatprep.subr.mxu0 0.0
    %972 = vmatpush1.msra.mxu0 0.0
    %973 = vmatprep.subr.mxu0 0.0
    %974 = vmatpush1.msra.mxu0 0.0
    %975 = vmatprep.subr.mxu0 0.0
    %976 = vmatpush1.msra.mxu0 0.0
    %977 = vmatprep.subr.mxu0 0.0
    %978 = vmatpush1.msra.mxu0 0.0
    %979 = vmatprep.subr.mxu0 0.0
    %980 = vmatpush1.msra.mxu0 0.0
    %981 = vmatprep.subr.mxu0 0.0
    %982 = vmatpush1.msra.mxu0 0.0
    %983 = vmatprep.subr.mxu0 0.0
    %984 = vmatpush1.msra.mxu0 0.0
    %985 = vmatprep.subr.mxu0 0.0
    %986 = vmatpush1.msra.mxu0 0.0
    %987 = vmatprep.subr.mxu0 0.0
    %988 = vmatpush1.msra.mxu0 0.0
    %989 = vmatprep.mubr.f32.mxu0 0.0
    %v990 = vand.u32 %v688, 4294901760
    %v991 = vsub.f32 %v688, %v990
    %992 = vmatmul.mubr.f32.gmra.mrb[0].mxu0 %v991
    %v993 = vpop.f32.mrb[0].mxu0
    %v994 = vadd.f32 %v896, %v993
    %v995 = vpop.f32.mrb[0].mxu0
    %996 = vmatprep.mubr.f32.mxu0 0.0
    %v997 = vand.u32 %v691, 4294901760
    %v998 = vsub.f32 %v691, %v997
    %999 = vmatmul.mubr.f32.gmra.mrb[0].mxu0 %v998
    %v1000 = vpop.f32.mrb[0].mxu0
    %v1001 = vadd.f32 %v902, %v1000
    %v1002 = vpop.f32.mrb[0].mxu0
    %1003 = vmatprep.mubr.f32.mxu0 0.0
    %v1004 = vand.u32 %v694, 4294901760
    %v1005 = vsub.f32 %v694, %v1004
    %1006 = vmatmul.mubr.f32.gmra.mrb[0].mxu0 %v1005
    %v1007 = vpop.f32.mrb[0].mxu0
    %v1008 = vadd.f32 %v908, %v1007
    %v1009 = vpop.f32.mrb[0].mxu0
    %1010 = vmatprep.mubr.f32.mxu0 0.0
    %v1011 = vand.u32 %v697, 4294901760
    %v1012 = vsub.f32 %v697, %v1011
    %1013 = vmatmul.mubr.f32.gmra.mrb[0].mxu0 %v1012
    %v1014 = vpop.f32.mrb[0].mxu0
    %v1015 = vadd.f32 %v914, %v1014
    %v1016 = vpop.f32.mrb[0].mxu0
    %1017 = vdwg.mxu0
    %1018 = vmatprep.subr.mxu0 0.0
    %v1019 = vand.u32 %v654, 4294901760
    %1020 = vmatpush1.msra.mxu0 %v1019
    %1021 = vmatprep.subr.mxu0 0.0
    %v1022 = vand.u32 %v655, 4294901760
    %1023 = vmatpush1.msra.mxu0 %v1022
    %1024 = vmatprep.subr.mxu0 0.0
    %v1025 = vand.u32 %v656, 4294901760
    %1026 = vmatpush1.msra.mxu0 %v1025
    %1027 = vmatprep.subr.mxu0 0.0
    %v1028 = vand.u32 %v657, 4294901760
    %1029 = vmatpush1.msra.mxu0 %v1028
    %1030 = vmatprep.subr.mxu0 0.0
    %1031 = vmatpush1.msra.mxu0 0.0
    %1032 = vmatprep.subr.mxu0 0.0
    %1033 = vmatpush1.msra.mxu0 0.0
    %1034 = vmatprep.subr.mxu0 0.0
    %1035 = vmatpush1.msra.mxu0 0.0
    %1036 = vmatprep.subr.mxu0 0.0
    %1037 = vmatpush1.msra.mxu0 0.0
    %1038 = vmatprep.subr.mxu0 0.0
    %1039 = vmatpush1.msra.mxu0 0.0
    %1040 = vmatprep.subr.mxu0 0.0
    %1041 = vmatpush1.msra.mxu0 0.0
    %1042 = vmatprep.subr.mxu0 0.0
    %1043 = vmatpush1.msra.mxu0 0.0
    %1044 = vmatprep.subr.mxu0 0.0
    %1045 = vmatpush1.msra.mxu0 0.0
    %1046 = vmatprep.subr.mxu0 0.0
    %1047 = vmatpush1.msra.mxu0 0.0
    %1048 = vmatprep.subr.mxu0 0.0
    %1049 = vmatpush1.msra.mxu0 0.0
    %1050 = vmatprep.subr.mxu0 0.0
    %1051 = vmatpush1.msra.mxu0 0.0
    %1052 = vmatprep.subr.mxu0 0.0
    %1053 = vmatpush1.msra.mxu0 0.0
    %1054 = vmatprep.subr.mxu0 0.0
    %1055 = vmatpush1.msra.mxu0 0.0
    %1056 = vmatprep.subr.mxu0 0.0
    %1057 = vmatpush1.msra.mxu0 0.0
    %1058 = vmatprep.subr.mxu0 0.0
    %1059 = vmatpush1.msra.mxu0 0.0
    %1060 = vmatprep.subr.mxu0 0.0
    %1061 = vmatpush1.msra.mxu0 0.0
    %1062 = vmatprep.subr.mxu0 0.0
    %1063 = vmatpush1.msra.mxu0 0.0
    %1064 = vmatprep.subr.mxu0 0.0
    %1065 = vmatpush1.msra.mxu0 0.0
    %1066 = vmatprep.subr.mxu0 0.0
    %1067 = vmatpush1.msra.mxu0 0.0
    %1068 = vmatprep.subr.mxu0 0.0
    %1069 = vmatpush1.msra.mxu0 0.0
    %1070 = vmatprep.subr.mxu0 0.0
    %1071 = vmatpush1.msra.mxu0 0.0
    %1072 = vmatprep.subr.mxu0 0.0
    %1073 = vmatpush1.msra.mxu0 0.0
    %1074 = vmatprep.subr.mxu0 0.0
    %1075 = vmatpush1.msra.mxu0 0.0
    %1076 = vmatprep.subr.mxu0 0.0
    %1077 = vmatpush1.msra.mxu0 0.0
    %1078 = vmatprep.subr.mxu0 0.0
    %1079 = vmatpush1.msra.mxu0 0.0
    %1080 = vmatprep.subr.mxu0 0.0
    %1081 = vmatpush1.msra.mxu0 0.0
    %1082 = vmatprep.subr.mxu0 0.0
    %1083 = vmatpush1.msra.mxu0 0.0
    %1084 = vmatprep.subr.mxu0 0.0
    %1085 = vmatpush1.msra.mxu0 0.0
    %1086 = vmatprep.mubr.f32.mxu0 0.0
    %v1087 = vand.u32 %v688, 4294901760
    %v1088 = vsub.f32 %v688, %v1087
    %v1089 = vand.u32 %v1088, 4294901760
    %1090 = vmatmul.mubr.f32.gmra.mrb[0].mxu0 %v1089
    %v1091 = vpop.f32.mrb[0].mxu0
    %v1092 = vadd.f32 %v994, %v1091
    %v1093 = vpop.f32.mrb[0].mxu0
    %1094 = vmatprep.mubr.f32.mxu0 0.0
    %v1095 = vand.u32 %v691, 4294901760
    %v1096 = vsub.f32 %v691, %v1095
    %v1097 = vand.u32 %v1096, 4294901760
    %1098 = vmatmul.mubr.f32.gmra.mrb[0].mxu0 %v1097
    %v1099 = vpop.f32.mrb[0].mxu0
    %v1100 = vadd.f32 %v1001, %v1099
    %v1101 = vpop.f32.mrb[0].mxu0
    %1102 = vmatprep.mubr.f32.mxu0 0.0
    %v1103 = vand.u32 %v694, 4294901760
    %v1104 = vsub.f32 %v694, %v1103
    %v1105 = vand.u32 %v1104, 4294901760
    %1106 = vmatmul.mubr.f32.gmra.mrb[0].mxu0 %v1105
    %v1107 = vpop.f32.mrb[0].mxu0
    %v1108 = vadd.f32 %v1008, %v1107
    %v1109 = vpop.f32.mrb[0].mxu0
    %1110 = vmatprep.mubr.f32.mxu0 0.0
    %v1111 = vand.u32 %v697, 4294901760
    %v1112 = vsub.f32 %v697, %v1111
    %v1113 = vand.u32 %v1112, 4294901760
    %1114 = vmatmul.mubr.f32.gmra.mrb[0].mxu0 %v1113
    %v1115 = vpop.f32.mrb[0].mxu0
    %v1116 = vadd.f32 %v1015, %v1115
    %v1117 = vpop.f32.mrb[0].mxu0
    %1118 = vdwg.mxu0
    %1119 = vmatprep.subr.mxu0 0.0
    %v1120 = vand.u32 %v654, 4294901760
    %v1121 = vsub.f32 %v654, %v1120
    %v1122 = vand.u32 %v1121, 4294901760
    %1123 = vmatpush1.msra.mxu0 %v1122
    %1124 = vmatprep.subr.mxu0 0.0
    %v1125 = vand.u32 %v655, 4294901760
    %v1126 = vsub.f32 %v655, %v1125
    %v1127 = vand.u32 %v1126, 4294901760
    %1128 = vmatpush1.msra.mxu0 %v1127
    %1129 = vmatprep.subr.mxu0 0.0
    %v1130 = vand.u32 %v656, 4294901760
    %v1131 = vsub.f32 %v656, %v1130
    %v1132 = vand.u32 %v1131, 4294901760
    %1133 = vmatpush1.msra.mxu0 %v1132
    %1134 = vmatprep.subr.mxu0 0.0
    %v1135 = vand.u32 %v657, 4294901760
    %v1136 = vsub.f32 %v657, %v1135
    %v1137 = vand.u32 %v1136, 4294901760
    %1138 = vmatpush1.msra.mxu0 %v1137
    %1139 = vmatprep.subr.mxu0 0.0
    %1140 = vmatpush1.msra.mxu0 0.0
    %1141 = vmatprep.subr.mxu0 0.0
    %1142 = vmatpush1.msra.mxu0 0.0
    %1143 = vmatprep.subr.mxu0 0.0
    %1144 = vmatpush1.msra.mxu0 0.0
    %1145 = vmatprep.subr.mxu0 0.0
    %1146 = vmatpush1.msra.mxu0 0.0
    %1147 = vmatprep.subr.mxu0 0.0
    %1148 = vmatpush1.msra.mxu0 0.0
    %1149 = vmatprep.subr.mxu0 0.0
    %1150 = vmatpush1.msra.mxu0 0.0
    %1151 = vmatprep.subr.mxu0 0.0
    %1152 = vmatpush1.msra.mxu0 0.0
    %1153 = vmatprep.subr.mxu0 0.0
    %1154 = vmatpush1.msra.mxu0 0.0
    %1155 = vmatprep.subr.mxu0 0.0
    %1156 = vmatpush1.msra.mxu0 0.0
    %1157 = vmatprep.subr.mxu0 0.0
    %1158 = vmatpush1.msra.mxu0 0.0
    %1159 = vmatprep.subr.mxu0 0.0
    %1160 = vmatpush1.msra.mxu0 0.0
    %1161 = vmatprep.subr.mxu0 0.0
    %1162 = vmatpush1.msra.mxu0 0.0
    %1163 = vmatprep.subr.mxu0 0.0
    %1164 = vmatpush1.msra.mxu0 0.0
    %1165 = vmatprep.subr.mxu0 0.0
    %1166 = vmatpush1.msra.mxu0 0.0
    %1167 = vmatprep.subr.mxu0 0.0
    %1168 = vmatpush1.msra.mxu0 0.0
    %1169 = vmatprep.subr.mxu0 0.0
    %1170 = vmatpush1.msra.mxu0 0.0
    %1171 = vmatprep.subr.mxu0 0.0
    %1172 = vmatpush1.msra.mxu0 0.0
    %1173 = vmatprep.subr.mxu0 0.0
    %1174 = vmatpush1.msra.mxu0 0.0
    %1175 = vmatprep.subr.mxu0 0.0
    %1176 = vmatpush1.msra.mxu0 0.0
    %1177 = vmatprep.subr.mxu0 0.0
    %1178 = vmatpush1.msra.mxu0 0.0
    %1179 = vmatprep.subr.mxu0 0.0
    %1180 = vmatpush1.msra.mxu0 0.0
    %1181 = vmatprep.subr.mxu0 0.0
    %1182 = vmatpush1.msra.mxu0 0.0
    %1183 = vmatprep.subr.mxu0 0.0
    %1184 = vmatpush1.msra.mxu0 0.0
    %1185 = vmatprep.subr.mxu0 0.0
    %1186 = vmatpush1.msra.mxu0 0.0
    %1187 = vmatprep.subr.mxu0 0.0
    %1188 = vmatpush1.msra.mxu0 0.0
    %1189 = vmatprep.subr.mxu0 0.0
    %1190 = vmatpush1.msra.mxu0 0.0
    %1191 = vmatprep.subr.mxu0 0.0
    %1192 = vmatpush1.msra.mxu0 0.0
    %1193 = vmatprep.subr.mxu0 0.0
    %1194 = vmatpush1.msra.mxu0 0.0
    %1195 = vmatprep.mubr.f32.mxu0 0.0
    %v1196 = vand.u32 %v688, 4294901760
    %1197 = vmatmul.mubr.f32.gmra.mrb[0].mxu0 %v1196
    %v1198 = vpop.f32.mrb[0].mxu0
    %v1199 = vadd.f32 %v1092, %v1198
    %v1200 = vpop.f32.mrb[0].mxu0
    %1201 = vmatprep.mubr.f32.mxu0 0.0
    %v1202 = vand.u32 %v691, 4294901760
    %1203 = vmatmul.mubr.f32.gmra.mrb[0].mxu0 %v1202
    %v1204 = vpop.f32.mrb[0].mxu0
    %v1205 = vadd.f32 %v1100, %v1204
    %v1206 = vpop.f32.mrb[0].mxu0
    %1207 = vmatprep.mubr.f32.mxu0 0.0
    %v1208 = vand.u32 %v694, 4294901760
    %1209 = vmatmul.mubr.f32.gmra.mrb[0].mxu0 %v1208
    %v1210 = vpop.f32.mrb[0].mxu0
    %v1211 = vadd.f32 %v1108, %v1210
    %v1212 = vpop.f32.mrb[0].mxu0
    %1213 = vmatprep.mubr.f32.mxu0 0.0
    %v1214 = vand.u32 %v697, 4294901760
    %1215 = vmatmul.mubr.f32.gmra.mrb[0].mxu0 %v1214
    %v1216 = vpop.f32.mrb[0].mxu0
    %v1217 = vadd.f32 %v1116, %v1216
    %v1218 = vpop.f32.mrb[0].mxu0
    %1219 = vdwg.mxu0
    %1220 = vmatprep.subr.mxu0 0.0
    %v1221 = vand.u32 %v654, 4294901760
    %1222 = vmatpush1.msra.mxu0 %v1221
    %1223 = vmatprep.subr.mxu0 0.0
    %v1224 = vand.u32 %v655, 4294901760
    %1225 = vmatpush1.msra.mxu0 %v1224
    %1226 = vmatprep.subr.mxu0 0.0
    %v1227 = vand.u32 %v656, 4294901760
    %1228 = vmatpush1.msra.mxu0 %v1227
    %1229 = vmatprep.subr.mxu0 0.0
    %v1230 = vand.u32 %v657, 4294901760
    %1231 = vmatpush1.msra.mxu0 %v1230
    %1232 = vmatprep.subr.mxu0 0.0
    %1233 = vmatpush1.msra.mxu0 0.0
    %1234 = vmatprep.subr.mxu0 0.0
    %1235 = vmatpush1.msra.mxu0 0.0
    %1236 = vmatprep.subr.mxu0 0.0
    %1237 = vmatpush1.msra.mxu0 0.0
    %1238 = vmatprep.subr.mxu0 0.0
    %1239 = vmatpush1.msra.mxu0 0.0
    %1240 = vmatprep.subr.mxu0 0.0
    %1241 = vmatpush1.msra.mxu0 0.0
    %1242 = vmatprep.subr.mxu0 0.0
    %1243 = vmatpush1.msra.mxu0 0.0
    %1244 = vmatprep.subr.mxu0 0.0
    %1245 = vmatpush1.msra.mxu0 0.0
    %1246 = vmatprep.subr.mxu0 0.0
    %1247 = vmatpush1.msra.mxu0 0.0
    %1248 = vmatprep.subr.mxu0 0.0
    %1249 = vmatpush1.msra.mxu0 0.0
    %1250 = vmatprep.subr.mxu0 0.0
    %1251 = vmatpush1.msra.mxu0 0.0
    %1252 = vmatprep.subr.mxu0 0.0
    %1253 = vmatpush1.msra.mxu0 0.0
    %1254 = vmatprep.subr.mxu0 0.0
    %1255 = vmatpush1.msra.mxu0 0.0
    %1256 = vmatprep.subr.mxu0 0.0
    %1257 = vmatpush1.msra.mxu0 0.0
    %1258 = vmatprep.subr.mxu0 0.0
    %1259 = vmatpush1.msra.mxu0 0.0
    %1260 = vmatprep.subr.mxu0 0.0
    %1261 = vmatpush1.msra.mxu0 0.0
    %1262 = vmatprep.subr.mxu0 0.0
    %1263 = vmatpush1.msra.mxu0 0.0
    %1264 = vmatprep.subr.mxu0 0.0
    %1265 = vmatpush1.msra.mxu0 0.0
    %1266 = vmatprep.subr.mxu0 0.0
    %1267 = vmatpush1.msra.mxu0 0.0
    %1268 = vmatprep.subr.mxu0 0.0
    %1269 = vmatpush1.msra.mxu0 0.0
    %1270 = vmatprep.subr.mxu0 0.0
    %1271 = vmatpush1.msra.mxu0 0.0
    %1272 = vmatprep.subr.mxu0 0.0
    %1273 = vmatpush1.msra.mxu0 0.0
    %1274 = vmatprep.subr.mxu0 0.0
    %1275 = vmatpush1.msra.mxu0 0.0
    %1276 = vmatprep.subr.mxu0 0.0
    %1277 = vmatpush1.msra.mxu0 0.0
    %1278 = vmatprep.subr.mxu0 0.0
    %1279 = vmatpush1.msra.mxu0 0.0
    %1280 = vmatprep.subr.mxu0 0.0
    %1281 = vmatpush1.msra.mxu0 0.0
    %1282 = vmatprep.subr.mxu0 0.0
    %1283 = vmatpush1.msra.mxu0 0.0
    %1284 = vmatprep.subr.mxu0 0.0
    %1285 = vmatpush1.msra.mxu0 0.0
    %1286 = vmatprep.subr.mxu0 0.0
    %1287 = vmatpush1.msra.mxu0 0.0
    %1288 = vmatprep.mubr.f32.mxu0 0.0
    %v1289 = vand.u32 %v688, 4294901760
    %1290 = vmatmul.mubr.f32.gmra.mrb[0].mxu0 %v1289
    %v1291 = vpop.f32.mrb[0].mxu0
    %v1292 = vadd.f32 %v1199, %v1291
    %v1293 = vpop.f32.mrb[0].mxu0
    %1294 = vmatprep.mubr.f32.mxu0 0.0
    %v1295 = vand.u32 %v691, 4294901760
    %1296 = vmatmul.mubr.f32.gmra.mrb[0].mxu0 %v1295
    %v1297 = vpop.f32.mrb[0].mxu0
    %v1298 = vadd.f32 %v1205, %v1297
    %v1299 = vpop.f32.mrb[0].mxu0
    %1300 = vmatprep.mubr.f32.mxu0 0.0
    %v1301 = vand.u32 %v694, 4294901760
    %1302 = vmatmul.mubr.f32.gmra.mrb[0].mxu0 %v1301
    %v1303 = vpop.f32.mrb[0].mxu0
    %v1304 = vadd.f32 %v1211, %v1303
    %v1305 = vpop.f32.mrb[0].mxu0
    %1306 = vmatprep.mubr.f32.mxu0 0.0
    %v1307 = vand.u32 %v697, 4294901760
    %1308 = vmatmul.mubr.f32.gmra.mrb[0].mxu0 %v1307
    %v1309 = vpop.f32.mrb[0].mxu0
    %v1310 = vadd.f32 %v1217, %v1309
    %v1311 = vpop.f32.mrb[0].mxu0
    %1312 = vdwg.mxu0
    %vm1313 = vcmp.gt.f32.partialorder %v1292, 0.0
    %vm1314 = vcmp.gt.f32.partialorder %v1298, 0.0
    %vm1315 = vcmp.gt.f32.partialorder %v1304, 0.0
    %vm1316 = vcmp.gt.f32.partialorder %v1310, 0.0
    %v1317 = vmul.f32 %v1292, 0.01
    %v1318 = vmul.f32 %v1298, 0.01
    %v1319 = vmul.f32 %v1304, 0.01
    %v1320 = vmul.f32 %v1310, 0.01
    %v1321 = vsel %vm1313, %v1292, %v1317
    %v1322 = vsel %vm1314, %v1298, %v1318
    %v1323 = vsel %vm1315, %v1304, %v1319
    %v1324 = vsel %vm1316, %v1310, %v1320
    %v1325 = vld [vmem:[%s5] sm:$0x1]
    %v1326 = vld [vmem:[#allocation2] sm:$0x1]
    %1328 = vset.pattern.permute.xlu0 0
    %1329 = vperm.xlu0 %1328, %v1326
    %v1330 = vpop.permute.xlu0 %1329
    %v1332 = vlaneseq
    %v1333 = vshrl.u32 %v1332, 7
    %v1334 = vsub.s32 0, %v1333
    %v1335 = vrot.slane %v1330, %v1334
    %v1337 = vsel %vm686, %v1325, 0
    %1339 = vmatprep.subr.mxu0 0.0
    %v1340 = vand.u32 %v1321, 4294901760
    %1341 = vmatpush1.msra.mxu0 %v1340
    %1342 = vmatprep.subr.mxu0 0.0
    %v1343 = vand.u32 %v1322, 4294901760
    %1344 = vmatpush1.msra.mxu0 %v1343
    %1345 = vmatprep.subr.mxu0 0.0
    %v1346 = vand.u32 %v1323, 4294901760
    %1347 = vmatpush1.msra.mxu0 %v1346
    %1348 = vmatprep.subr.mxu0 0.0
    %v1349 = vand.u32 %v1324, 4294901760
    %1350 = vmatpush1.msra.mxu0 %v1349
    %1351 = vmatprep.subr.mxu0 0.0
    %1352 = vmatpush1.msra.mxu0 0.0
    %1353 = vmatprep.subr.mxu0 0.0
    %1354 = vmatpush1.msra.mxu0 0.0
    %1355 = vmatprep.subr.mxu0 0.0
    %1356 = vmatpush1.msra.mxu0 0.0
    %1357 = vmatprep.subr.mxu0 0.0
    %1358 = vmatpush1.msra.mxu0 0.0
    %1359 = vmatprep.subr.mxu0 0.0
    %1360 = vmatpush1.msra.mxu0 0.0
    %1361 = vmatprep.subr.mxu0 0.0
    %1362 = vmatpush1.msra.mxu0 0.0
    %1363 = vmatprep.subr.mxu0 0.0
    %1364 = vmatpush1.msra.mxu0 0.0
    %1365 = vmatprep.subr.mxu0 0.0
    %1366 = vmatpush1.msra.mxu0 0.0
    %1367 = vmatprep.subr.mxu0 0.0
    %1368 = vmatpush1.msra.mxu0 0.0
    %1369 = vmatprep.subr.mxu0 0.0
    %1370 = vmatpush1.msra.mxu0 0.0
    %1371 = vmatprep.subr.mxu0 0.0
    %1372 = vmatpush1.msra.mxu0 0.0
    %1373 = vmatprep.subr.mxu0 0.0
    %1374 = vmatpush1.msra.mxu0 0.0
    %1375 = vmatprep.subr.mxu0 0.0
    %1376 = vmatpush1.msra.mxu0 0.0
    %1377 = vmatprep.subr.mxu0 0.0
    %1378 = vmatpush1.msra.mxu0 0.0
    %1379 = vmatprep.subr.mxu0 0.0
    %1380 = vmatpush1.msra.mxu0 0.0
    %1381 = vmatprep.subr.mxu0 0.0
    %1382 = vmatpush1.msra.mxu0 0.0
    %1383 = vmatprep.subr.mxu0 0.0
    %1384 = vmatpush1.msra.mxu0 0.0
    %1385 = vmatprep.subr.mxu0 0.0
    %1386 = vmatpush1.msra.mxu0 0.0
    %1387 = vmatprep.subr.mxu0 0.0
    %1388 = vmatpush1.msra.mxu0 0.0
    %1389 = vmatprep.subr.mxu0 0.0
    %1390 = vmatpush1.msra.mxu0 0.0
    %1391 = vmatprep.subr.mxu0 0.0
    %1392 = vmatpush1.msra.mxu0 0.0
    %1393 = vmatprep.subr.mxu0 0.0
    %1394 = vmatpush1.msra.mxu0 0.0
    %1395 = vmatprep.subr.mxu0 0.0
    %1396 = vmatpush1.msra.mxu0 0.0
    %1397 = vmatprep.subr.mxu0 0.0
    %1398 = vmatpush1.msra.mxu0 0.0
    %1399 = vmatprep.subr.mxu0 0.0
    %1400 = vmatpush1.msra.mxu0 0.0
    %1401 = vmatprep.subr.mxu0 0.0
    %1402 = vmatpush1.msra.mxu0 0.0
    %1403 = vmatprep.subr.mxu0 0.0
    %1404 = vmatpush1.msra.mxu0 0.0
    %1405 = vmatprep.subr.mxu0 0.0
    %1406 = vmatpush1.msra.mxu0 0.0
    %1407 = vmatprep.mubr.f32.mxu0 0.0
    %v1408 = vand.u32 %v1337, 4294901760
    %v1409 = vsub.f32 %v1337, %v1408
    %v1410 = vand.u32 %v1409, 4294901760
    %v1411 = vsub.f32 %v1409, %v1410
    %v1412 = vand.u32 %v1411, 4294901760
    %1413 = vmatmul.mubr.f32.gmra.mrb[0].mxu0 %v1412
    %v1414 = vpop.f32.mrb[0].mxu0
    %v1415 = vadd.f32 %v1335, %v1414
    %v1416 = vpop.f32.mrb[0].mxu0
    %1417 = vdwg.mxu0
    %1418 = vmatprep.subr.mxu0 0.0
    %v1419 = vand.u32 %v1321, 4294901760
    %v1420 = vsub.f32 %v1321, %v1419
    %v1421 = vand.u32 %v1420, 4294901760
    %v1422 = vsub.f32 %v1420, %v1421
    %v1423 = vand.u32 %v1422, 4294901760
    %1424 = vmatpush1.msra.mxu0 %v1423
    %1425 = vmatprep.subr.mxu0 0.0
    %v1426 = vand.u32 %v1322, 4294901760
    %v1427 = vsub.f32 %v1322, %v1426
    %v1428 = vand.u32 %v1427, 4294901760
    %v1429 = vsub.f32 %v1427, %v1428
    %v1430 = vand.u32 %v1429, 4294901760
    %1431 = vmatpush1.msra.mxu0 %v1430
    %1432 = vmatprep.subr.mxu0 0.0
    %v1433 = vand.u32 %v1323, 4294901760
    %v1434 = vsub.f32 %v1323, %v1433
    %v1435 = vand.u32 %v1434, 4294901760
    %v1436 = vsub.f32 %v1434, %v1435
    %v1437 = vand.u32 %v1436, 4294901760
    %1438 = vmatpush1.msra.mxu0 %v1437
    %1439 = vmatprep.subr.mxu0 0.0
    %v1440 = vand.u32 %v1324, 4294901760
    %v1441 = vsub.f32 %v1324, %v1440
    %v1442 = vand.u32 %v1441, 4294901760
    %v1443 = vsub.f32 %v1441, %v1442
    %v1444 = vand.u32 %v1443, 4294901760
    %1445 = vmatpush1.msra.mxu0 %v1444
    %1446 = vmatprep.subr.mxu0 0.0
    %1447 = vmatpush1.msra.mxu0 0.0
    %1448 = vmatprep.subr.mxu0 0.0
    %1449 = vmatpush1.msra.mxu0 0.0
    %1450 = vmatprep.subr.mxu0 0.0
    %1451 = vmatpush1.msra.mxu0 0.0
    %1452 = vmatprep.subr.mxu0 0.0
    %1453 = vmatpush1.msra.mxu0 0.0
    %1454 = vmatprep.subr.mxu0 0.0
    %1455 = vmatpush1.msra.mxu0 0.0
    %1456 = vmatprep.subr.mxu0 0.0
    %1457 = vmatpush1.msra.mxu0 0.0
    %1458 = vmatprep.subr.mxu0 0.0
    %1459 = vmatpush1.msra.mxu0 0.0
    %1460 = vmatprep.subr.mxu0 0.0
    %1461 = vmatpush1.msra.mxu0 0.0
    %1462 = vmatprep.subr.mxu0 0.0
    %1463 = vmatpush1.msra.mxu0 0.0
    %1464 = vmatprep.subr.mxu0 0.0
    %1465 = vmatpush1.msra.mxu0 0.0
    %1466 = vmatprep.subr.mxu0 0.0
    %1467 = vmatpush1.msra.mxu0 0.0
    %1468 = vmatprep.subr.mxu0 0.0
    %1469 = vmatpush1.msra.mxu0 0.0
    %1470 = vmatprep.subr.mxu0 0.0
    %1471 = vmatpush1.msra.mxu0 0.0
    %1472 = vmatprep.subr.mxu0 0.0
    %1473 = vmatpush1.msra.mxu0 0.0
    %1474 = vmatprep.subr.mxu0 0.0
    %1475 = vmatpush1.msra.mxu0 0.0
    %1476 = vmatprep.subr.mxu0 0.0
    %1477 = vmatpush1.msra.mxu0 0.0
    %1478 = vmatprep.subr.mxu0 0.0
    %1479 = vmatpush1.msra.mxu0 0.0
    %1480 = vmatprep.subr.mxu0 0.0
    %1481 = vmatpush1.msra.mxu0 0.0
    %1482 = vmatprep.subr.mxu0 0.0
    %1483 = vmatpush1.msra.mxu0 0.0
    %1484 = vmatprep.subr.mxu0 0.0
    %1485 = vmatpush1.msra.mxu0 0.0
    %1486 = vmatprep.subr.mxu0 0.0
    %1487 = vmatpush1.msra.mxu0 0.0
    %1488 = vmatprep.subr.mxu0 0.0
    %1489 = vmatpush1.msra.mxu0 0.0
    %1490 = vmatprep.subr.mxu0 0.0
    %1491 = vmatpush1.msra.mxu0 0.0
    %1492 = vmatprep.subr.mxu0 0.0
    %1493 = vmatpush1.msra.mxu0 0.0
    %1494 = vmatprep.subr.mxu0 0.0
    %1495 = vmatpush1.msra.mxu0 0.0
    %1496 = vmatprep.subr.mxu0 0.0
    %1497 = vmatpush1.msra.mxu0 0.0
    %1498 = vmatprep.subr.mxu0 0.0
    %1499 = vmatpush1.msra.mxu0 0.0
    %1500 = vmatprep.subr.mxu0 0.0
    %1501 = vmatpush1.msra.mxu0 0.0
    %1502 = vmatprep.mubr.f32.mxu0 0.0
    %v1503 = vand.u32 %v1337, 4294901760
    %1504 = vmatmul.mubr.f32.gmra.mrb[0].mxu0 %v1503
    %v1505 = vpop.f32.mrb[0].mxu0
    %v1506 = vadd.f32 %v1415, %v1505
    %v1507 = vpop.f32.mrb[0].mxu0
    %1508 = vdwg.mxu0
    %1509 = vmatprep.subr.mxu0 0.0
    %v1510 = vand.u32 %v1321, 4294901760
    %v1511 = vsub.f32 %v1321, %v1510
    %1512 = vmatpush1.msra.mxu0 %v1511
    %1513 = vmatprep.subr.mxu0 0.0
    %v1514 = vand.u32 %v1322, 4294901760
    %v1515 = vsub.f32 %v1322, %v1514
    %1516 = vmatpush1.msra.mxu0 %v1515
    %1517 = vmatprep.subr.mxu0 0.0
    %v1518 = vand.u32 %v1323, 4294901760
    %v1519 = vsub.f32 %v1323, %v1518
    %1520 = vmatpush1.msra.mxu0 %v1519
    %1521 = vmatprep.subr.mxu0 0.0
    %v1522 = vand.u32 %v1324, 4294901760
    %v1523 = vsub.f32 %v1324, %v1522
    %1524 = vmatpush1.msra.mxu0 %v1523
    %1525 = vmatprep.subr.mxu0 0.0
    %1526 = vmatpush1.msra.mxu0 0.0
    %1527 = vmatprep.subr.mxu0 0.0
    %1528 = vmatpush1.msra.mxu0 0.0
    %1529 = vmatprep.subr.mxu0 0.0
    %1530 = vmatpush1.msra.mxu0 0.0
    %1531 = vmatprep.subr.mxu0 0.0
    %1532 = vmatpush1.msra.mxu0 0.0
    %1533 = vmatprep.subr.mxu0 0.0
    %1534 = vmatpush1.msra.mxu0 0.0
    %1535 = vmatprep.subr.mxu0 0.0
    %1536 = vmatpush1.msra.mxu0 0.0
    %1537 = vmatprep.subr.mxu0 0.0
    %1538 = vmatpush1.msra.mxu0 0.0
    %1539 = vmatprep.subr.mxu0 0.0
    %1540 = vmatpush1.msra.mxu0 0.0
    %1541 = vmatprep.subr.mxu0 0.0
    %1542 = vmatpush1.msra.mxu0 0.0
    %1543 = vmatprep.subr.mxu0 0.0
    %1544 = vmatpush1.msra.mxu0 0.0
    %1545 = vmatprep.subr.mxu0 0.0
    %1546 = vmatpush1.msra.mxu0 0.0
    %1547 = vmatprep.subr.mxu0 0.0
    %1548 = vmatpush1.msra.mxu0 0.0
    %1549 = vmatprep.subr.mxu0 0.0
    %1550 = vmatpush1.msra.mxu0 0.0
    %1551 = vmatprep.subr.mxu0 0.0
    %1552 = vmatpush1.msra.mxu0 0.0
    %1553 = vmatprep.subr.mxu0 0.0
    %1554 = vmatpush1.msra.mxu0 0.0
    %1555 = vmatprep.subr.mxu0 0.0
    %1556 = vmatpush1.msra.mxu0 0.0
    %1557 = vmatprep.subr.mxu0 0.0
    %1558 = vmatpush1.msra.mxu0 0.0
    %1559 = vmatprep.subr.mxu0 0.0
    %1560 = vmatpush1.msra.mxu0 0.0
    %1561 = vmatprep.subr.mxu0 0.0
    %1562 = vmatpush1.msra.mxu0 0.0
    %1563 = vmatprep.subr.mxu0 0.0
    %1564 = vmatpush1.msra.mxu0 0.0
    %1565 = vmatprep.subr.mxu0 0.0
    %1566 = vmatpush1.msra.mxu0 0.0
    %1567 = vmatprep.subr.mxu0 0.0
    %1568 = vmatpush1.msra.mxu0 0.0
    %1569 = vmatprep.subr.mxu0 0.0
    %1570 = vmatpush1.msra.mxu0 0.0
    %1571 = vmatprep.subr.mxu0 0.0
    %1572 = vmatpush1.msra.mxu0 0.0
    %1573 = vmatprep.subr.mxu0 0.0
    %1574 = vmatpush1.msra.mxu0 0.0
    %1575 = vmatprep.subr.mxu0 0.0
    %1576 = vmatpush1.msra.mxu0 0.0
    %1577 = vmatprep.subr.mxu0 0.0
    %1578 = vmatpush1.msra.mxu0 0.0
    %1579 = vmatprep.subr.mxu0 0.0
    %1580 = vmatpush1.msra.mxu0 0.0
    %1581 = vmatprep.mubr.f32.mxu0 0.0
    %v1582 = vand.u32 %v1337, 4294901760
    %v1583 = vsub.f32 %v1337, %v1582
    %1584 = vmatmul.mubr.f32.gmra.mrb[0].mxu0 %v1583
    %v1585 = vpop.f32.mrb[0].mxu0
    %v1586 = vadd.f32 %v1506, %v1585
    %v1587 = vpop.f32.mrb[0].mxu0
    %1588 = vdwg.mxu0
    %1589 = vmatprep.subr.mxu0 0.0
    %v1590 = vand.u32 %v1321, 4294901760
    %1591 = vmatpush1.msra.mxu0 %v1590
    %1592 = vmatprep.subr.mxu0 0.0
    %v1593 = vand.u32 %v1322, 4294901760
    %1594 = vmatpush1.msra.mxu0 %v1593
    %1595 = vmatprep.subr.mxu0 0.0
    %v1596 = vand.u32 %v1323, 4294901760
    %1597 = vmatpush1.msra.mxu0 %v1596
    %1598 = vmatprep.subr.mxu0 0.0
    %v1599 = vand.u32 %v1324, 4294901760
    %1600 = vmatpush1.msra.mxu0 %v1599
    %1601 = vmatprep.subr.mxu0 0.0
    %1602 = vmatpush1.msra.mxu0 0.0
    %1603 = vmatprep.subr.mxu0 0.0
    %1604 = vmatpush1.msra.mxu0 0.0
    %1605 = vmatprep.subr.mxu0 0.0
    %1606 = vmatpush1.msra.mxu0 0.0
    %1607 = vmatprep.subr.mxu0 0.0
    %1608 = vmatpush1.msra.mxu0 0.0
    %1609 = vmatprep.subr.mxu0 0.0
    %1610 = vmatpush1.msra.mxu0 0.0
    %1611 = vmatprep.subr.mxu0 0.0
    %1612 = vmatpush1.msra.mxu0 0.0
    %1613 = vmatprep.subr.mxu0 0.0
    %1614 = vmatpush1.msra.mxu0 0.0
    %1615 = vmatprep.subr.mxu0 0.0
    %1616 = vmatpush1.msra.mxu0 0.0
    %1617 = vmatprep.subr.mxu0 0.0
    %1618 = vmatpush1.msra.mxu0 0.0
    %1619 = vmatprep.subr.mxu0 0.0
    %1620 = vmatpush1.msra.mxu0 0.0
    %1621 = vmatprep.subr.mxu0 0.0
    %1622 = vmatpush1.msra.mxu0 0.0
    %1623 = vmatprep.subr.mxu0 0.0
    %1624 = vmatpush1.msra.mxu0 0.0
    %1625 = vmatprep.subr.mxu0 0.0
    %1626 = vmatpush1.msra.mxu0 0.0
    %1627 = vmatprep.subr.mxu0 0.0
    %1628 = vmatpush1.msra.mxu0 0.0
    %1629 = vmatprep.subr.mxu0 0.0
    %1630 = vmatpush1.msra.mxu0 0.0
    %1631 = vmatprep.subr.mxu0 0.0
    %1632 = vmatpush1.msra.mxu0 0.0
    %1633 = vmatprep.subr.mxu0 0.0
    %1634 = vmatpush1.msra.mxu0 0.0
    %1635 = vmatprep.subr.mxu0 0.0
    %1636 = vmatpush1.msra.mxu0 0.0
    %1637 = vmatprep.subr.mxu0 0.0
    %1638 = vmatpush1.msra.mxu0 0.0
    %1639 = vmatprep.subr.mxu0 0.0
    %1640 = vmatpush1.msra.mxu0 0.0
    %1641 = vmatprep.subr.mxu0 0.0
    %1642 = vmatpush1.msra.mxu0 0.0
    %1643 = vmatprep.subr.mxu0 0.0
    %1644 = vmatpush1.msra.mxu0 0.0
    %1645 = vmatprep.subr.mxu0 0.0
    %1646 = vmatpush1.msra.mxu0 0.0
    %1647 = vmatprep.subr.mxu0 0.0
    %1648 = vmatpush1.msra.mxu0 0.0
    %1649 = vmatprep.subr.mxu0 0.0
    %1650 = vmatpush1.msra.mxu0 0.0
    %1651 = vmatprep.subr.mxu0 0.0
    %1652 = vmatpush1.msra.mxu0 0.0
    %1653 = vmatprep.subr.mxu0 0.0
    %1654 = vmatpush1.msra.mxu0 0.0
    %1655 = vmatprep.subr.mxu0 0.0
    %1656 = vmatpush1.msra.mxu0 0.0
    %1657 = vmatprep.mubr.f32.mxu0 0.0
    %v1658 = vand.u32 %v1337, 4294901760
    %v1659 = vsub.f32 %v1337, %v1658
    %v1660 = vand.u32 %v1659, 4294901760
    %1661 = vmatmul.mubr.f32.gmra.mrb[0].mxu0 %v1660
    %v1662 = vpop.f32.mrb[0].mxu0
    %v1663 = vadd.f32 %v1586, %v1662
    %v1664 = vpop.f32.mrb[0].mxu0
    %1665 = vdwg.mxu0
    %1666 = vmatprep.subr.mxu0 0.0
    %v1667 = vand.u32 %v1321, 4294901760
    %v1668 = vsub.f32 %v1321, %v1667
    %v1669 = vand.u32 %v1668, 4294901760
    %1670 = vmatpush1.msra.mxu0 %v1669
    %1671 = vmatprep.subr.mxu0 0.0
    %v1672 = vand.u32 %v1322, 4294901760
    %v1673 = vsub.f32 %v1322, %v1672
    %v1674 = vand.u32 %v1673, 4294901760
    %1675 = vmatpush1.msra.mxu0 %v1674
    %1676 = vmatprep.subr.mxu0 0.0
    %v1677 = vand.u32 %v1323, 4294901760
    %v1678 = vsub.f32 %v1323, %v1677
    %v1679 = vand.u32 %v1678, 4294901760
    %1680 = vmatpush1.msra.mxu0 %v1679
    %1681 = vmatprep.subr.mxu0 0.0
    %v1682 = vand.u32 %v1324, 4294901760
    %v1683 = vsub.f32 %v1324, %v1682
    %v1684 = vand.u32 %v1683, 4294901760
    %1685 = vmatpush1.msra.mxu0 %v1684
    %1686 = vmatprep.subr.mxu0 0.0
    %1687 = vmatpush1.msra.mxu0 0.0
    %1688 = vmatprep.subr.mxu0 0.0
    %1689 = vmatpush1.msra.mxu0 0.0
    %1690 = vmatprep.subr.mxu0 0.0
    %1691 = vmatpush1.msra.mxu0 0.0
    %1692 = vmatprep.subr.mxu0 0.0
    %1693 = vmatpush1.msra.mxu0 0.0
    %1694 = vmatprep.subr.mxu0 0.0
    %1695 = vmatpush1.msra.mxu0 0.0
    %1696 = vmatprep.subr.mxu0 0.0
    %1697 = vmatpush1.msra.mxu0 0.0
    %1698 = vmatprep.subr.mxu0 0.0
    %1699 = vmatpush1.msra.mxu0 0.0
    %1700 = vmatprep.subr.mxu0 0.0
    %1701 = vmatpush1.msra.mxu0 0.0
    %1702 = vmatprep.subr.mxu0 0.0
    %1703 = vmatpush1.msra.mxu0 0.0
    %1704 = vmatprep.subr.mxu0 0.0
    %1705 = vmatpush1.msra.mxu0 0.0
    %1706 = vmatprep.subr.mxu0 0.0
    %1707 = vmatpush1.msra.mxu0 0.0
    %1708 = vmatprep.subr.mxu0 0.0
    %1709 = vmatpush1.msra.mxu0 0.0
    %1710 = vmatprep.subr.mxu0 0.0
    %1711 = vmatpush1.msra.mxu0 0.0
    %1712 = vmatprep.subr.mxu0 0.0
    %1713 = vmatpush1.msra.mxu0 0.0
    %1714 = vmatprep.subr.mxu0 0.0
    %1715 = vmatpush1.msra.mxu0 0.0
    %1716 = vmatprep.subr.mxu0 0.0
    %1717 = vmatpush1.msra.mxu0 0.0
    %1718 = vmatprep.subr.mxu0 0.0
    %1719 = vmatpush1.msra.mxu0 0.0
    %1720 = vmatprep.subr.mxu0 0.0
    %1721 = vmatpush1.msra.mxu0 0.0
    %1722 = vmatprep.subr.mxu0 0.0
    %1723 = vmatpush1.msra.mxu0 0.0
    %1724 = vmatprep.subr.mxu0 0.0
    %1725 = vmatpush1.msra.mxu0 0.0
    %1726 = vmatprep.subr.mxu0 0.0
    %1727 = vmatpush1.msra.mxu0 0.0
    %1728 = vmatprep.subr.mxu0 0.0
    %1729 = vmatpush1.msra.mxu0 0.0
    %1730 = vmatprep.subr.mxu0 0.0
    %1731 = vmatpush1.msra.mxu0 0.0
    %1732 = vmatprep.subr.mxu0 0.0
    %1733 = vmatpush1.msra.mxu0 0.0
    %1734 = vmatprep.subr.mxu0 0.0
    %1735 = vmatpush1.msra.mxu0 0.0
    %1736 = vmatprep.subr.mxu0 0.0
    %1737 = vmatpush1.msra.mxu0 0.0
    %1738 = vmatprep.subr.mxu0 0.0
    %1739 = vmatpush1.msra.mxu0 0.0
    %1740 = vmatprep.subr.mxu0 0.0
    %1741 = vmatpush1.msra.mxu0 0.0
    %1742 = vmatprep.mubr.f32.mxu0 0.0
    %v1743 = vand.u32 %v1337, 4294901760
    %1744 = vmatmul.mubr.f32.gmra.mrb[0].mxu0 %v1743
    %v1745 = vpop.f32.mrb[0].mxu0
    %v1746 = vadd.f32 %v1663, %v1745
    %v1747 = vpop.f32.mrb[0].mxu0
    %1748 = vdwg.mxu0
    %1749 = vmatprep.subr.mxu0 0.0
    %v1750 = vand.u32 %v1321, 4294901760
    %1751 = vmatpush1.msra.mxu0 %v1750
    %1752 = vmatprep.subr.mxu0 0.0
    %v1753 = vand.u32 %v1322, 4294901760
    %1754 = vmatpush1.msra.mxu0 %v1753
    %1755 = vmatprep.subr.mxu0 0.0
    %v1756 = vand.u32 %v1323, 4294901760
    %1757 = vmatpush1.msra.mxu0 %v1756
    %1758 = vmatprep.subr.mxu0 0.0
    %v1759 = vand.u32 %v1324, 4294901760
    %1760 = vmatpush1.msra.mxu0 %v1759
    %1761 = vmatprep.subr.mxu0 0.0
    %1762 = vmatpush1.msra.mxu0 0.0
    %1763 = vmatprep.subr.mxu0 0.0
    %1764 = vmatpush1.msra.mxu0 0.0
    %1765 = vmatprep.subr.mxu0 0.0
    %1766 = vmatpush1.msra.mxu0 0.0
    %1767 = vmatprep.subr.mxu0 0.0
    %1768 = vmatpush1.msra.mxu0 0.0
    %1769 = vmatprep.subr.mxu0 0.0
    %1770 = vmatpush1.msra.mxu0 0.0
    %1771 = vmatprep.subr.mxu0 0.0
    %1772 = vmatpush1.msra.mxu0 0.0
    %1773 = vmatprep.subr.mxu0 0.0
    %1774 = vmatpush1.msra.mxu0 0.0
    %1775 = vmatprep.subr.mxu0 0.0
    %1776 = vmatpush1.msra.mxu0 0.0
    %1777 = vmatprep.subr.mxu0 0.0
    %1778 = vmatpush1.msra.mxu0 0.0
    %1779 = vmatprep.subr.mxu0 0.0
    %1780 = vmatpush1.msra.mxu0 0.0
    %1781 = vmatprep.subr.mxu0 0.0
    %1782 = vmatpush1.msra.mxu0 0.0
    %1783 = vmatprep.subr.mxu0 0.0
    %1784 = vmatpush1.msra.mxu0 0.0
    %1785 = vmatprep.subr.mxu0 0.0
    %1786 = vmatpush1.msra.mxu0 0.0
    %1787 = vmatprep.subr.mxu0 0.0
    %1788 = vmatpush1.msra.mxu0 0.0
    %1789 = vmatprep.subr.mxu0 0.0
    %1790 = vmatpush1.msra.mxu0 0.0
    %1791 = vmatprep.subr.mxu0 0.0
    %1792 = vmatpush1.msra.mxu0 0.0
    %1793 = vmatprep.subr.mxu0 0.0
    %1794 = vmatpush1.msra.mxu0 0.0
    %1795 = vmatprep.subr.mxu0 0.0
    %1796 = vmatpush1.msra.mxu0 0.0
    %1797 = vmatprep.subr.mxu0 0.0
    %1798 = vmatpush1.msra.mxu0 0.0
    %1799 = vmatprep.subr.mxu0 0.0
    %1800 = vmatpush1.msra.mxu0 0.0
    %1801 = vmatprep.subr.mxu0 0.0
    %1802 = vmatpush1.msra.mxu0 0.0
    %1803 = vmatprep.subr.mxu0 0.0
    %1804 = vmatpush1.msra.mxu0 0.0
    %1805 = vmatprep.subr.mxu0 0.0
    %1806 = vmatpush1.msra.mxu0 0.0
    %1807 = vmatprep.subr.mxu0 0.0
    %1808 = vmatpush1.msra.mxu0 0.0
    %1809 = vmatprep.subr.mxu0 0.0
    %1810 = vmatpush1.msra.mxu0 0.0
    %1811 = vmatprep.subr.mxu0 0.0
    %1812 = vmatpush1.msra.mxu0 0.0
    %1813 = vmatprep.subr.mxu0 0.0
    %1814 = vmatpush1.msra.mxu0 0.0
    %1815 = vmatprep.subr.mxu0 0.0
    %1816 = vmatpush1.msra.mxu0 0.0
    %1817 = vmatprep.mubr.f32.mxu0 0.0
    %v1818 = vand.u32 %v1337, 4294901760
    %1819 = vmatmul.mubr.f32.gmra.mrb[0].mxu0 %v1818
    %v1820 = vpop.f32.mrb[0].mxu0
    %v1821 = vadd.f32 %v1746, %v1820
    %v1822 = vpop.f32.mrb[0].mxu0
    %1823 = vdwg.mxu0
    %vm1824 = vcmp.gt.f32.partialorder %v1821, 0.0
    %v1825 = vmul.f32 %v1821, 0.01
    %v1826 = vsel %vm1824, %v1821, %v1825
    %1827 = vst [vmem:[#allocation3] sm:$0x1] %v1826
    // Predicated region
    $region30: #{tpu_custom_call.1} parent=1 // pred_check
      _
    $region31: #{tpu_custom_call.1} parent=1 // pred_check_branch
      %1829 = sbr.rel (0) target = $region33
    $region32: #{tpu_custom_call.1} parent=1 // pred_region
      %s1831 = ssub.s32 16, 16
      %1832 = vsyncadd [#allocation4], %s1831
      %s1834 = sshll.u32 [#allocation3], 4
      %s1835 = int_to_ptr.vmem [resolvable:$true] %s1834
      %1837 = dma.vmem_to_hbm [thread:$0]  %s1835, 16, %s7, [#allocation4]
    $region33: #{tpu_custom_call.1} parent=1 // pred_fallthru
      _
    // Predicated region
    $region34: #{tpu_custom_call.1} parent=1 // pred_check
      _
    $region35: #{tpu_custom_call.1} parent=1 // pred_check_branch
      %1839 = sbr.rel (0) target = $region37
    $region36: #{tpu_custom_call.1} parent=1 // pred_region
      %1840 = dma.done [#allocation4], 16
    $region37: #{tpu_custom_call.1} parent=1 // pred_fallthru
      _
    %1841 = vsyncpa [#allocation4], 1

</llo_original>
